<compile_context>
chip_gen: v5e
topology: v5e:2x2
jax: 0.10.0
libtpu: 0.0.40
codegen_flags: <defaults>
</compile_context>

<pallas_src>
import functools

import numpy as np
import jax
import jax.numpy as jnp
from jax.experimental import pallas as pl
from jax.experimental.pallas import tpu as pltpu

POOL = 10              # nn.AdaptiveAvgPool2d((10, 10))
PP = POOL * POOL       # 100 pooled positions
TAP_PAD = 128          # lane-aligned stride for the 9 conv taps


# ---------------- static operator matrices (host-side, cached) ----------------
def _adaptive_pool_matrix(in_size: int, out_size: int) -> np.ndarray:
    """P[o, i] so that P @ v == AdaptiveAvgPool1d(out_size)(v) (PyTorch bins)."""
    m = np.zeros((out_size, in_size), np.float32)
    for o in range(out_size):
        start = (o * in_size) // out_size
        end = -((-(o + 1) * in_size) // out_size)  # ceil((o+1)*in/out)
        m[o, start:end] = 1.0 / (end - start)
    return m


def _nearest_upsample_matrix(out_size: int, in_size: int) -> np.ndarray:
    """U[o, i] = 1 iff i == floor(o * in / out)  (PyTorch mode='nearest')."""
    m = np.zeros((out_size, in_size), np.float32)
    for o in range(out_size):
        src = min((o * in_size) // out_size, in_size - 1)
        m[o, src] = 1.0
    return m


def _shift_matrices(n: int) -> np.ndarray:
    """9 (n*n, n*n) 0/1 matrices: S[t] @ flat(img) = flat(shift by tap t, zero pad)."""
    S = np.zeros((9, n * n, n * n), np.float32)
    for dy in range(3):
        for dx in range(3):
            t = dy * 3 + dx
            for p in range(n):
                for q in range(n):
                    ih, iw = p + dy - 1, q + dx - 1
                    if 0 <= ih < n and 0 <= iw < n:
                        S[t, p * n + q, ih * n + iw] = 1.0
    return S


@functools.lru_cache(maxsize=None)
def _shift_stack_T() -> np.ndarray:
    """(100, 9*128): tap t occupies lane block [t*128, t*128+100) with S_t^T."""
    s = _shift_matrices(POOL)
    st = np.zeros((PP, 9 * TAP_PAD), np.float32)
    for t in range(9):
        st[:, t * TAP_PAD:t * TAP_PAD + PP] = s[t].T
    return st


@functools.lru_cache(maxsize=None)
def _pool_upsample_ops(h: int, w: int):
    """ppT: (H*W, 100) adaptive-pool matrix^T; uuT: (100, H*W) nearest-upsample^T."""
    ph = _adaptive_pool_matrix(h, POOL)
    pw = _adaptive_pool_matrix(w, POOL)
    uh = _nearest_upsample_matrix(h, POOL)
    uw = _nearest_upsample_matrix(w, POOL)
    ppT = np.ascontiguousarray(np.kron(ph, pw).T)
    uuT = np.ascontiguousarray(np.kron(uh, uw).T)
    return ppT, uuT


def _pick_hw_tile(hw: int, max_tile: int = 2048) -> int:
    """Largest multiple-of-128 divisor of hw (<= max_tile), else full hw.

    Last-dim blocks must be 128-aligned or full-extent; a divisor tile keeps the
    pooling matmul exact (no garbage padding rows enter the accumulation)."""
    tile = None
    t = 128
    while t <= min(hw, max_tile):
        if hw % t == 0:
            tile = t
        t += 128
    return tile if tile is not None else hw


def _vmem_limit(block_bytes: int) -> int:
    # Double-buffered blocks + headroom, capped at v7x physical VMEM per core.
    return int(min(64 << 20, max(16 << 20, 2 * block_bytes + (8 << 20))))


# ------------------------------- Pallas kernels -------------------------------
def _weights_kernel(x_ref, ppT_ref, stcat_ref, w1T_ref, b1_ref, w2T_ref, b2_ref,
                    o_ref, pool_acc):
    # x_ref:   (1, C, THW)    ppT_ref:  (THW, 100)     stcat_ref: (100, 9*128)
    # w1T_ref: (9, Cm, C)     b1_ref:   (Cm, 1)
    # w2T_ref: (9, C, Cm)     b2_ref:   (C, 1)
    # o_ref:   (1, C, 100)    pool_acc: (C, 100) f32 scratch
    k = pl.program_id(1)

    @pl.when(k == 0)
    def _():
        pool_acc[...] = jnp.zeros_like(pool_acc)

    # Partial adaptive average pool for this HW tile: (C, THW) @ (THW, 100).
    pool_acc[...] += jnp.dot(x_ref[0], ppT_ref[...],
                             preferred_element_type=jnp.float32)

    @pl.when(k == pl.num_programs(1) - 1)
    def _():
        stcat = stcat_ref[...]                               # (100, 9*128)

        def conv3x3(zT, wT_ref, bias):                       # zT: (Cin, 100)
            cout = wT_ref.shape[1]
            # One fused shift matmul: all 9 zero-padded 3x3 taps at once.
            shifted = jnp.dot(zT, stcat,
                              preferred_element_type=jnp.float32)  # (Cin, 9*128)
            acc = jnp.zeros((cout, TAP_PAD), jnp.float32)
            for t in range(9):                               # static, unrolled
                acc = acc + jnp.dot(
                    wT_ref[t], shifted[:, t * TAP_PAD:(t + 1) * TAP_PAD],
                    preferred_element_type=jnp.float32)      # (Cout, 128)
            return acc[:, :PP] + bias                        # (Cout, 100)

        y1 = jnp.maximum(conv3x3(pool_acc[...], w1T_ref, b1_ref[...]), 0.0)
        o_ref[0] = conv3x3(y1, w2T_ref, b2_ref[...])


def _apply_kernel(w_ref, x_ref, uuT_ref, o_ref):
    # w_ref: (1, C, 100)   x_ref/o_ref: (1, C, THW)   uuT_ref: (100, THW)
    x = x_ref[0]
    wgt = jnp.dot(w_ref[0], uuT_ref[...],
                  preferred_element_type=jnp.float32)        # nearest upsample
    o_ref[0] = x * wgt + x


# --------------------------------- wrappers ------------------------------------
@jax.jit
def channel_attention_spatial_level(x_nchw, w1_hwio, b1, w2_hwio, b2):
    """One level of ChannelAttention_Spatial. x: (N, C, H, W) -> same shape."""
    N, C, H, W = x_nchw.shape
    Cm = w1_hwio.shape[-1]
    HW = H * W
    thw = _pick_hw_tile(HW)
    n_tiles = HW // thw

    # Lane-dense layout: (N, C, H*W) -- a pure reshape of NCHW, no transposes.
    x = x_nchw.reshape(N, C, HW).astype(jnp.float32)

    ppT_np, uuT_np = _pool_upsample_ops(H, W)
    ppT = jnp.asarray(ppT_np)                    # (HW, 100)
    uuT = jnp.asarray(uuT_np)                    # (100, HW)
    stcat = jnp.asarray(_shift_stack_T())        # (100, 9*128)

    # Conv weights HWIO (3,3,Cin,Cout) -> (9, Cout, Cin) so w[t] = W_t^T.
    w1T = jnp.transpose(w1_hwio, (0, 1, 3, 2)).reshape(9, Cm, C).astype(jnp.float32)
    w2T = jnp.transpose(w2_hwio, (0, 1, 3, 2)).reshape(9, C, Cm).astype(jnp.float32)
    b1c = b1.reshape(Cm, 1).astype(jnp.float32)
    b2c = b2.reshape(C, 1).astype(jnp.float32)

    # ---- pass 1: attention weights on the pooled 10x10 map -> (N, C, 100) ----
    blk1 = 4 * (C * thw + thw * PP + PP * 9 * TAP_PAD
                + 9 * Cm * C + Cm + 9 * C * Cm + C + 2 * C * PP)
    w_pooled = pl.pallas_call(
        _weights_kernel,
        out_shape=jax.ShapeDtypeStruct((N, C, PP), jnp.float32),
        grid=(N, n_tiles),
        in_specs=[
            pl.BlockSpec((1, C, thw), lambda n, k: (n, 0, k)),
            pl.BlockSpec((thw, PP), lambda n, k: (k, 0)),
            pl.BlockSpec((PP, 9 * TAP_PAD), lambda n, k: (0, 0)),
            pl.BlockSpec((9, Cm, C), lambda n, k: (0, 0, 0)),
            pl.BlockSpec((Cm, 1), lambda n, k: (0, 0)),
            pl.BlockSpec((9, C, Cm), lambda n, k: (0, 0, 0)),
            pl.BlockSpec((C, 1), lambda n, k: (0, 0)),
        ],
        out_specs=pl.BlockSpec((1, C, PP), lambda n, k: (n, 0, 0)),
        scratch_shapes=[pltpu.VMEM((C, PP), jnp.float32)],
        compiler_params=pltpu.CompilerParams(
            dimension_semantics=("parallel", "arbitrary"),
            vmem_limit_bytes=_vmem_limit(blk1)),
        cost_estimate=pl.CostEstimate(
            flops=2 * N * (HW * PP * C
                           + PP * 9 * TAP_PAD * (C + Cm)
                           + 2 * 9 * TAP_PAD * C * Cm),
            transcendentals=0,
            bytes_accessed=4 * (N * HW * C + HW * PP + N * C * PP)),
    )(x, ppT, stcat, w1T, b1c, w2T, b2c)

    # ---- pass 2: nearest upsample + residual, tiled over HW (both axes parallel) ----
    blk2 = 4 * (C * PP + 2 * C * thw + PP * thw)
    out = pl.pallas_call(
        _apply_kernel,
        out_shape=jax.ShapeDtypeStruct((N, C, HW), jnp.float32),
        grid=(N, n_tiles),
        in_specs=[
            pl.BlockSpec((1, C, PP), lambda n, k: (n, 0, 0)),
            pl.BlockSpec((1, C, thw), lambda n, k: (n, 0, k)),
            pl.BlockSpec((PP, thw), lambda n, k: (0, k)),
        ],
        out_specs=pl.BlockSpec((1, C, thw), lambda n, k: (n, 0, k)),
        compiler_params=pltpu.CompilerParams(
            dimension_semantics=("parallel", "parallel"),
            vmem_limit_bytes=_vmem_limit(blk2)),
        cost_estimate=pl.CostEstimate(
            flops=2 * N * (PP * HW * C + HW * C),
            transcendentals=0,
            bytes_accessed=4 * (2 * N * HW * C + PP * HW + N * C * PP)),
    )(w_pooled, x, uuT)

    return out.reshape(N, C, H, W)


def channel_attention_spatial(inputs, params):
    """Mirrors ChannelAttention_Spatial.forward over a list of feature maps."""
    return [channel_attention_spatial_level(x, *p) for x, p in zip(inputs, params)]


# ---------------------- plain-JAX reference (for checking) --------------------
def _reference_level(x, w1_hwio, b1, w2_hwio, b2):
    N, C, H, W = x.shape
    hi = jax.lax.Precision.HIGHEST
    ph = jnp.asarray(_adaptive_pool_matrix(H, POOL))
    pw = jnp.asarray(_adaptive_pool_matrix(W, POOL))
    uh = jnp.asarray(_nearest_upsample_matrix(H, POOL))
    uw = jnp.asarray(_nearest_upsample_matrix(W, POOL))
    pooled = jnp.einsum('ph,nchw->ncpw', ph, x, precision=hi)
    pooled = jnp.einsum('qw,ncpw->ncpq', pw, pooled, precision=hi)
    y1 = jax.lax.conv_general_dilated(
        pooled, w1_hwio, (1, 1), 'SAME',
        dimension_numbers=('NCHW', 'HWIO', 'NCHW'),
        precision=hi) + b1.reshape(1, -1, 1, 1)
    y1 = jnp.maximum(y1, 0.0)
    y2 = jax.lax.conv_general_dilated(
        y1, w2_hwio, (1, 1), 'SAME',
        dimension_numbers=('NCHW', 'HWIO', 'NCHW'),
        precision=hi) + b2.reshape(1, -1, 1, 1)
    wgt = jnp.einsum('hp,ncpq->nchq', uh, y2, precision=hi)
    wgt = jnp.einsum('wq,nchq->nchw', uw, wgt, precision=hi)
    return x * wgt + x


# ------------------------------------ main ------------------------------------
if __name__ == "__main__":
    key = jax.random.PRNGKey(0)
    channel_list = [4, 8]
    input_shapes = [(2, 4, 16, 16), (2, 8, 12, 12)]

    inputs, params = [], []
    for c, shp in zip(channel_list, input_shapes):
        cm = c // 2
        key, k1, k2, k3, k4, kx = jax.random.split(key, 6)
        w1 = jax.random.normal(k1, (3, 3, c, cm), jnp.float32) * 0.1   # HWIO
        b1 = jax.random.normal(k2, (cm,), jnp.float32) * 0.1
        w2 = jax.random.normal(k3, (3, 3, cm, c), jnp.float32) * 0.1   # HWIO
        b2 = jax.random.normal(k4, (c,), jnp.float32) * 0.1
        x = jax.random.normal(kx, shp, jnp.float32)
        inputs.append(x)
        params.append((w1, b1, w2, b2))

    outs = channel_attention_spatial(inputs, params)
    outs = [jax.block_until_ready(o) for o in outs]

    # sanity-check against plain-JAX reference of the PyTorch semantics
    for x, p, o in zip(inputs, params, outs):
        ref = _reference_level(x, *p)
        if not jnp.allclose(o, ref, atol=1e-4, rtol=1e-4):
            raise AssertionError("Pallas kernel mismatch vs reference")

    print("KERNEL_OK")
</pallas_src>

<mosaic_0001>
module attributes {stable_mosaic.version = 11 : i64} {
  func.func @_apply_kernel(%arg0: i32, %arg1: i32, %arg2: memref<1x4x100xf32, #tpu.memory_space<vmem>>, %arg3: memref<1x4x256xf32, #tpu.memory_space<vmem>>, %arg4: memref<100x256xf32, #tpu.memory_space<vmem>>, %arg5: memref<1x4x256xf32, #tpu.memory_space<vmem>>) attributes {dimension_semantics = [#tpu.dimension_semantics<parallel>, #tpu.dimension_semantics<parallel>], iteration_bounds = array<i64: 2, 1>, scalar_prefetch = 0 : i64, scratch_operands = 0 : i64, tpu.core_type = #tpu.core_type<tc>, window_params = [{transform_indices = @transform_0, window_bounds = array<i64: 1, 4, 100>}, {transform_indices = @transform_1, window_bounds = array<i64: 1, 4, 256>}, {transform_indices = @transform_2, window_bounds = array<i64: 100, 256>}, {transform_indices = @transform_3, window_bounds = array<i64: 1, 4, 256>}]} {
    %c0 = arith.constant 0 : index
    %c0_0 = arith.constant 0 : index
    %c0_1 = arith.constant 0 : index
    %0 = vector.load %arg3[%c0, %c0_0, %c0_1] : memref<1x4x256xf32, #tpu.memory_space<vmem>>, vector<1x4x256xf32>
    %1 = vector.shape_cast %0 : vector<1x4x256xf32> to vector<4x256xf32>
    %c0_2 = arith.constant 0 : index
    %c0_3 = arith.constant 0 : index
    %c0_4 = arith.constant 0 : index
    %2 = vector.load %arg2[%c0_2, %c0_3, %c0_4] : memref<1x4x100xf32, #tpu.memory_space<vmem>>, vector<1x4x100xf32>
    %3 = vector.shape_cast %2 : vector<1x4x100xf32> to vector<4x100xf32>
    %c0_5 = arith.constant 0 : index
    %c0_6 = arith.constant 0 : index
    %4 = vector.load %arg4[%c0_5, %c0_6] : memref<100x256xf32, #tpu.memory_space<vmem>>, vector<100x256xf32>
    %cst = arith.constant dense<0.000000e+00> : vector<4x256xf32>
    %5 = tpu.matmul %3, %4, %cst {dimension_numbers = #tpu.dot_dimension_numbers<[1], [0], [0], [1], [0, 0, 1, 1], [], []>} : vector<4x100xf32>, vector<100x256xf32>, vector<4x256xf32> -> vector<4x256xf32>
    %6 = arith.mulf %1, %5 : vector<4x256xf32>
    %7 = arith.addf %6, %1 : vector<4x256xf32>
    %c0_7 = arith.constant 0 : index
    %c0_8 = arith.constant 0 : index
    %c0_9 = arith.constant 0 : index
    %8 = vector.load %arg5[%c0_7, %c0_8, %c0_9] : memref<1x4x256xf32, #tpu.memory_space<vmem>>, vector<1x4x256xf32>
    %9 = vector.shape_cast %8 : vector<1x4x256xf32> to vector<4x256xf32>
    %10 = vector.shape_cast %7 : vector<4x256xf32> to vector<1x4x256xf32>
    tpu.vector_store %arg5[%c0_7, %c0_8, %c0_9], %10 {strides = array<i32>} : memref<1x4x256xf32, #tpu.memory_space<vmem>>, vector<1x4x256xf32>,
    return
  }
  func.func @transform_0(%arg0: i32, %arg1: i32) -> (i32, i32, i32) {
    %c0_i32 = arith.constant 0 : i32
    %c0_i32_0 = arith.constant 0 : i32
    %c0_i32_1 = arith.constant 0 : i32
    return %arg0, %c0_i32, %c0_i32_0 : i32, i32, i32
  }
  func.func @transform_1(%arg0: i32, %arg1: i32) -> (i32, i32, i32) {
    %c0_i32 = arith.constant 0 : i32
    %c0_i32_0 = arith.constant 0 : i32
    return %arg0, %c0_i32, %arg1 : i32, i32, i32
  }
  func.func @transform_2(%arg0: i32, %arg1: i32) -> (i32, i32) {
    %c0_i32 = arith.constant 0 : i32
    %c0_i32_0 = arith.constant 0 : i32
    return %c0_i32, %arg1 : i32, i32
  }
  func.func @transform_3(%arg0: i32, %arg1: i32) -> (i32, i32, i32) {
    %c0_i32 = arith.constant 0 : i32
    %c0_i32_0 = arith.constant 0 : i32
    return %arg0, %c0_i32, %arg1 : i32, i32, i32
  }
}

module attributes {stable_mosaic.version = 11 : i64} {
  func.func @_weights_kernel(%arg0: i32, %arg1: i32, %arg2: memref<1x4x256xf32, #tpu.memory_space<vmem>>, %arg3: memref<256x100xf32, #tpu.memory_space<vmem>>, %arg4: memref<100x1152xf32, #tpu.memory_space<vmem>>, %arg5: memref<9x2x4xf32, #tpu.memory_space<vmem>>, %arg6: memref<2x1xf32, #tpu.memory_space<vmem>>, %arg7: memref<9x4x2xf32, #tpu.memory_space<vmem>>, %arg8: memref<4x1xf32, #tpu.memory_space<vmem>>, %arg9: memref<1x4x100xf32, #tpu.memory_space<vmem>>, %arg10: memref<4x100xf32, #tpu.memory_space<vmem>>) attributes {dimension_semantics = [#tpu.dimension_semantics<parallel>, #tpu.dimension_semantics<arbitrary>], iteration_bounds = array<i64: 2, 1>, scalar_prefetch = 0 : i64, scratch_operands = 1 : i64, tpu.core_type = #tpu.core_type<tc>, window_params = [{transform_indices = @transform_0, window_bounds = array<i64: 1, 4, 256>}, {transform_indices = @transform_1, window_bounds = array<i64: 256, 100>}, {pipeline_mode = #tpu.pipeline_mode<synchronous>, transform_indices = @transform_2, window_bounds = array<i64: 100, 1152>}, {pipeline_mode = #tpu.pipeline_mode<synchronous>, transform_indices = @transform_3, window_bounds = array<i64: 9, 2, 4>}, {pipeline_mode = #tpu.pipeline_mode<synchronous>, transform_indices = @transform_4, window_bounds = array<i64: 2, 1>}, {pipeline_mode = #tpu.pipeline_mode<synchronous>, transform_indices = @transform_5, window_bounds = array<i64: 9, 4, 2>}, {pipeline_mode = #tpu.pipeline_mode<synchronous>, transform_indices = @transform_6, window_bounds = array<i64: 4, 1>}, {transform_indices = @transform_7, window_bounds = array<i64: 1, 4, 100>}]} {
    %c0_i32 = arith.constant 0 : i32
    %0 = arith.cmpi eq, %arg1, %c0_i32 : i32
    %1 = arith.extui %0 : i1 to i32
    %c0_i32_0 = arith.constant 0 : i32
    %2 = arith.cmpi ne, %1, %c0_i32_0 : i32
    scf.if %2 {
      %cst_11 = arith.constant 0.000000e+00 : f32
      %13 = vector.broadcast %cst_11 : f32 to vector<4x100xf32>
      %c0_12 = arith.constant 0 : index
      %c0_13 = arith.constant 0 : index
      %14 = vector.load %arg10[%c0_12, %c0_13] : memref<4x100xf32, #tpu.memory_space<vmem>>, vector<4x100xf32>
      tpu.vector_store %arg10[%c0_12, %c0_13], %13 {strides = array<i32>} : memref<4x100xf32, #tpu.memory_space<vmem>>, vector<4x100xf32>,
    } else {
    }
    %c0 = arith.constant 0 : index
    %c0_1 = arith.constant 0 : index
    %3 = vector.load %arg10[%c0, %c0_1] : memref<4x100xf32, #tpu.memory_space<vmem>>, vector<4x100xf32>
    %c0_2 = arith.constant 0 : index
    %c0_3 = arith.constant 0 : index
    %c0_4 = arith.constant 0 : index
    %4 = vector.load %arg2[%c0_2, %c0_3, %c0_4] : memref<1x4x256xf32, #tpu.memory_space<vmem>>, vector<1x4x256xf32>
    %5 = vector.shape_cast %4 : vector<1x4x256xf32> to vector<4x256xf32>
    %c0_5 = arith.constant 0 : index
    %c0_6 = arith.constant 0 : index
    %6 = vector.load %arg3[%c0_5, %c0_6] : memref<256x100xf32, #tpu.memory_space<vmem>>, vector<256x100xf32>
    %cst = arith.constant dense<0.000000e+00> : vector<4x100xf32>
    %7 = tpu.matmul %5, %6, %cst {dimension_numbers = #tpu.dot_dimension_numbers<[1], [0], [0], [1], [0, 0, 1, 1], [], []>} : vector<4x256xf32>, vector<256x100xf32>, vector<4x100xf32> -> vector<4x100xf32>
    %8 = arith.addf %3, %7 : vector<4x100xf32>
    %c0_7 = arith.constant 0 : index
    %c0_8 = arith.constant 0 : index
    %9 = vector.load %arg10[%c0_7, %c0_8] : memref<4x100xf32, #tpu.memory_space<vmem>>, vector<4x100xf32>
    tpu.vector_store %arg10[%c0_7, %c0_8], %8 {strides = array<i32>} : memref<4x100xf32, #tpu.memory_space<vmem>>, vector<4x100xf32>,
    %c0_i32_9 = arith.constant 0 : i32
    %10 = arith.cmpi eq, %arg1, %c0_i32_9 : i32
    %11 = arith.extui %10 : i1 to i32
    %c0_i32_10 = arith.constant 0 : i32
    %12 = arith.cmpi ne, %11, %c0_i32_10 : i32
    scf.if %12 {
      %c0_11 = arith.constant 0 : index
      %c0_12 = arith.constant 0 : index
      %13 = vector.load %arg4[%c0_11, %c0_12] : memref<100x1152xf32, #tpu.memory_space<vmem>>, vector<100x1152xf32>
      %c0_13 = arith.constant 0 : index
      %c0_14 = arith.constant 0 : index
      %14 = vector.load %arg10[%c0_13, %c0_14] : memref<4x100xf32, #tpu.memory_space<vmem>>, vector<4x100xf32>
      %c0_15 = arith.constant 0 : index
      %c0_16 = arith.constant 0 : index
      %15 = vector.load %arg6[%c0_15, %c0_16] : memref<2x1xf32, #tpu.memory_space<vmem>>, vector<2x1xf32>
      %cst_17 = arith.constant dense<0.000000e+00> : vector<4x1152xf32>
      %16 = tpu.matmul %14, %13, %cst_17 {dimension_numbers = #tpu.dot_dimension_numbers<[1], [0], [0], [1], [0, 0, 1, 1], [], []>} : vector<4x100xf32>, vector<100x1152xf32>, vector<4x1152xf32> -> vector<4x1152xf32>
      %cst_18 = arith.constant 0.000000e+00 : f32
      %17 = vector.broadcast %cst_18 : f32 to vector<2x128xf32>
      %c0_19 = arith.constant 0 : index
      %c0_20 = arith.constant 0 : index
      %c0_21 = arith.constant 0 : index
      %18 = vector.load %arg5[%c0_19, %c0_20, %c0_21] : memref<9x2x4xf32, #tpu.memory_space<vmem>>, vector<1x2x4xf32>
      %19 = vector.shape_cast %18 : vector<1x2x4xf32> to vector<2x4xf32>
      %20 = vector.extract_strided_slice %16 {offsets = [0, 0], sizes = [4, 128], strides = [1, 1]} : vector<4x1152xf32> to vector<4x128xf32>
      %cst_22 = arith.constant dense<0.000000e+00> : vector<2x128xf32>
      %21 = tpu.matmul %19, %20, %cst_22 {dimension_numbers = #tpu.dot_dimension_numbers<[1], [0], [0], [1], [0, 0, 1, 1], [], []>} : vector<2x4xf32>, vector<4x128xf32>, vector<2x128xf32> -> vector<2x128xf32>
      %22 = arith.addf %17, %21 : vector<2x128xf32>
      %c1 = arith.constant 1 : index
      %c0_23 = arith.constant 0 : index
      %c0_24 = arith.constant 0 : index
      %23 = vector.load %arg5[%c1, %c0_23, %c0_24] : memref<9x2x4xf32, #tpu.memory_space<vmem>>, vector<1x2x4xf32>
      %24 = vector.shape_cast %23 : vector<1x2x4xf32> to vector<2x4xf32>
      %25 = vector.extract_strided_slice %16 {offsets = [0, 128], sizes = [4, 128], strides = [1, 1]} : vector<4x1152xf32> to vector<4x128xf32>
      %cst_25 = arith.constant dense<0.000000e+00> : vector<2x128xf32>
      %26 = tpu.matmul %24, %25, %cst_25 {dimension_numbers = #tpu.dot_dimension_numbers<[1], [0], [0], [1], [0, 0, 1, 1], [], []>} : vector<2x4xf32>, vector<4x128xf32>, vector<2x128xf32> -> vector<2x128xf32>
      %27 = arith.addf %22, %26 : vector<2x128xf32>
      %c2 = arith.constant 2 : index
      %c0_26 = arith.constant 0 : index
      %c0_27 = arith.constant 0 : index
      %28 = vector.load %arg5[%c2, %c0_26, %c0_27] : memref<9x2x4xf32, #tpu.memory_space<vmem>>, vector<1x2x4xf32>
      %29 = vector.shape_cast %28 : vector<1x2x4xf32> to vector<2x4xf32>
      %30 = vector.extract_strided_slice %16 {offsets = [0, 256], sizes = [4, 128], strides = [1, 1]} : vector<4x1152xf32> to vector<4x128xf32>
      %cst_28 = arith.constant dense<0.000000e+00> : vector<2x128xf32>
      %31 = tpu.matmul %29, %30, %cst_28 {dimension_numbers = #tpu.dot_dimension_numbers<[1], [0], [0], [1], [0, 0, 1, 1], [], []>} : vector<2x4xf32>, vector<4x128xf32>, vector<2x128xf32> -> vector<2x128xf32>
      %32 = arith.addf %27, %31 : vector<2x128xf32>
      %c3 = arith.constant 3 : index
      %c0_29 = arith.constant 0 : index
      %c0_30 = arith.constant 0 : index
      %33 = vector.load %arg5[%c3, %c0_29, %c0_30] : memref<9x2x4xf32, #tpu.memory_space<vmem>>, vector<1x2x4xf32>
      %34 = vector.shape_cast %33 : vector<1x2x4xf32> to vector<2x4xf32>
      %35 = vector.extract_strided_slice %16 {offsets = [0, 384], sizes = [4, 128], strides = [1, 1]} : vector<4x1152xf32> to vector<4x128xf32>
      %cst_31 = arith.constant dense<0.000000e+00> : vector<2x128xf32>
      %36 = tpu.matmul %34, %35, %cst_31 {dimension_numbers = #tpu.dot_dimension_numbers<[1], [0], [0], [1], [0, 0, 1, 1], [], []>} : vector<2x4xf32>, vector<4x128xf32>, vector<2x128xf32> -> vector<2x128xf32>
      %37 = arith.addf %32, %36 : vector<2x128xf32>
      %c4 = arith.constant 4 : index
      %c0_32 = arith.constant 0 : index
      %c0_33 = arith.constant 0 : index
      %38 = vector.load %arg5[%c4, %c0_32, %c0_33] : memref<9x2x4xf32, #tpu.memory_space<vmem>>, vector<1x2x4xf32>
      %39 = vector.shape_cast %38 : vector<1x2x4xf32> to vector<2x4xf32>
      %40 = vector.extract_strided_slice %16 {offsets = [0, 512], sizes = [4, 128], strides = [1, 1]} : vector<4x1152xf32> to vector<4x128xf32>
      %cst_34 = arith.constant dense<0.000000e+00> : vector<2x128xf32>
      %41 = tpu.matmul %39, %40, %cst_34 {dimension_numbers = #tpu.dot_dimension_numbers<[1], [0], [0], [1], [0, 0, 1, 1], [], []>} : vector<2x4xf32>, vector<4x128xf32>, vector<2x128xf32> -> vector<2x128xf32>
      %42 = arith.addf %37, %41 : vector<2x128xf32>
      %c5 = arith.constant 5 : index
      %c0_35 = arith.constant 0 : index
      %c0_36 = arith.constant 0 : index
      %43 = vector.load %arg5[%c5, %c0_35, %c0_36] : memref<9x2x4xf32, #tpu.memory_space<vmem>>, vector<1x2x4xf32>
      %44 = vector.shape_cast %43 : vector<1x2x4xf32> to vector<2x4xf32>
      %45 = vector.extract_strided_slice %16 {offsets = [0, 640], sizes = [4, 128], strides = [1, 1]} : vector<4x1152xf32> to vector<4x128xf32>
      %cst_37 = arith.constant dense<0.000000e+00> : vector<2x128xf32>
      %46 = tpu.matmul %44, %45, %cst_37 {dimension_numbers = #tpu.dot_dimension_numbers<[1], [0], [0], [1], [0, 0, 1, 1], [], []>} : vector<2x4xf32>, vector<4x128xf32>, vector<2x128xf32> -> vector<2x128xf32>
      %47 = arith.addf %42, %46 : vector<2x128xf32>
      %c6 = arith.constant 6 : index
      %c0_38 = arith.constant 0 : index
      %c0_39 = arith.constant 0 : index
      %48 = vector.load %arg5[%c6, %c0_38, %c0_39] : memref<9x2x4xf32, #tpu.memory_space<vmem>>, vector<1x2x4xf32>
      %49 = vector.shape_cast %48 : vector<1x2x4xf32> to vector<2x4xf32>
      %50 = vector.extract_strided_slice %16 {offsets = [0, 768], sizes = [4, 128], strides = [1, 1]} : vector<4x1152xf32> to vector<4x128xf32>
      %cst_40 = arith.constant dense<0.000000e+00> : vector<2x128xf32>
      %51 = tpu.matmul %49, %50, %cst_40 {dimension_numbers = #tpu.dot_dimension_numbers<[1], [0], [0], [1], [0, 0, 1, 1], [], []>} : vector<2x4xf32>, vector<4x128xf32>, vector<2x128xf32> -> vector<2x128xf32>
      %52 = arith.addf %47, %51 : vector<2x128xf32>
      %c7 = arith.constant 7 : index
      %c0_41 = arith.constant 0 : index
      %c0_42 = arith.constant 0 : index
      %53 = vector.load %arg5[%c7, %c0_41, %c0_42] : memref<9x2x4xf32, #tpu.memory_space<vmem>>, vector<1x2x4xf32>
      %54 = vector.shape_cast %53 : vector<1x2x4xf32> to vector<2x4xf32>
      %55 = vector.extract_strided_slice %16 {offsets = [0, 896], sizes = [4, 128], strides = [1, 1]} : vector<4x1152xf32> to vector<4x128xf32>
      %cst_43 = arith.constant dense<0.000000e+00> : vector<2x128xf32>
      %56 = tpu.matmul %54, %55, %cst_43 {dimension_numbers = #tpu.dot_dimension_numbers<[1], [0], [0], [1], [0, 0, 1, 1], [], []>} : vector<2x4xf32>, vector<4x128xf32>, vector<2x128xf32> -> vector<2x128xf32>
      %57 = arith.addf %52, %56 : vector<2x128xf32>
      %c8 = arith.constant 8 : index
      %c0_44 = arith.constant 0 : index
      %c0_45 = arith.constant 0 : index
      %58 = vector.load %arg5[%c8, %c0_44, %c0_45] : memref<9x2x4xf32, #tpu.memory_space<vmem>>, vector<1x2x4xf32>
      %59 = vector.shape_cast %58 : vector<1x2x4xf32> to vector<2x4xf32>
      %60 = vector.extract_strided_slice %16 {offsets = [0, 1024], sizes = [4, 128], strides = [1, 1]} : vector<4x1152xf32> to vector<4x128xf32>
      %cst_46 = arith.constant dense<0.000000e+00> : vector<2x128xf32>
      %61 = tpu.matmul %59, %60, %cst_46 {dimension_numbers = #tpu.dot_dimension_numbers<[1], [0], [0], [1], [0, 0, 1, 1], [], []>} : vector<2x4xf32>, vector<4x128xf32>, vector<2x128xf32> -> vector<2x128xf32>
      %62 = arith.addf %57, %61 : vector<2x128xf32>
      %63 = vector.extract_strided_slice %62 {offsets = [0, 0], sizes = [2, 100], strides = [1, 1]} : vector<2x128xf32> to vector<2x100xf32>
      %64 = vector.broadcast %15 : vector<2x1xf32> to vector<2x100xf32>
      %65 = arith.addf %63, %64 : vector<2x100xf32>
      %cst_47 = arith.constant 0.000000e+00 : f32
      %66 = vector.broadcast %cst_47 : f32 to vector<2x100xf32>
      %67 = arith.maximumf %65, %66 : vector<2x100xf32>
      %c0_48 = arith.constant 0 : index
      %c0_49 = arith.constant 0 : index
      %68 = vector.load %arg8[%c0_48, %c0_49] : memref<4x1xf32, #tpu.memory_space<vmem>>, vector<4x1xf32>
      %cst_50 = arith.constant dense<0.000000e+00> : vector<2x1152xf32>
      %69 = tpu.matmul %67, %13, %cst_50 {dimension_numbers = #tpu.dot_dimension_numbers<[1], [0], [0], [1], [0, 0, 1, 1], [], []>} : vector<2x100xf32>, vector<100x1152xf32>, vector<2x1152xf32> -> vector<2x1152xf32>
      %cst_51 = arith.constant 0.000000e+00 : f32
      %70 = vector.broadcast %cst_51 : f32 to vector<4x128xf32>
      %c0_52 = arith.constant 0 : index
      %c0_53 = arith.constant 0 : index
      %c0_54 = arith.constant 0 : index
      %71 = vector.load %arg7[%c0_52, %c0_53, %c0_54] : memref<9x4x2xf32, #tpu.memory_space<vmem>>, vector<1x4x2xf32>
      %72 = vector.shape_cast %71 : vector<1x4x2xf32> to vector<4x2xf32>
      %73 = vector.extract_strided_slice %69 {offsets = [0, 0], sizes = [2, 128], strides = [1, 1]} : vector<2x1152xf32> to vector<2x128xf32>
      %cst_55 = arith.constant dense<0.000000e+00> : vector<4x128xf32>
      %74 = tpu.matmul %72, %73, %cst_55 {dimension_numbers = #tpu.dot_dimension_numbers<[1], [0], [0], [1], [0, 0, 1, 1], [], []>} : vector<4x2xf32>, vector<2x128xf32>, vector<4x128xf32> -> vector<4x128xf32>
      %75 = arith.addf %70, %74 : vector<4x128xf32>
      %c1_56 = arith.constant 1 : index
      %c0_57 = arith.constant 0 : index
      %c0_58 = arith.constant 0 : index
      %76 = vector.load %arg7[%c1_56, %c0_57, %c0_58] : memref<9x4x2xf32, #tpu.memory_space<vmem>>, vector<1x4x2xf32>
      %77 = vector.shape_cast %76 : vector<1x4x2xf32> to vector<4x2xf32>
      %78 = vector.extract_strided_slice %69 {offsets = [0, 128], sizes = [2, 128], strides = [1, 1]} : vector<2x1152xf32> to vector<2x128xf32>
      %cst_59 = arith.constant dense<0.000000e+00> : vector<4x128xf32>
      %79 = tpu.matmul %77, %78, %cst_59 {dimension_numbers = #tpu.dot_dimension_numbers<[1], [0], [0], [1], [0, 0, 1, 1], [], []>} : vector<4x2xf32>, vector<2x128xf32>, vector<4x128xf32> -> vector<4x128xf32>
      %80 = arith.addf %75, %79 : vector<4x128xf32>
      %c2_60 = arith.constant 2 : index
      %c0_61 = arith.constant 0 : index
      %c0_62 = arith.constant 0 : index
      %81 = vector.load %arg7[%c2_60, %c0_61, %c0_62] : memref<9x4x2xf32, #tpu.memory_space<vmem>>, vector<1x4x2xf32>
      %82 = vector.shape_cast %81 : vector<1x4x2xf32> to vector<4x2xf32>
      %83 = vector.extract_strided_slice %69 {offsets = [0, 256], sizes = [2, 128], strides = [1, 1]} : vector<2x1152xf32> to vector<2x128xf32>
      %cst_63 = arith.constant dense<0.000000e+00> : vector<4x128xf32>
      %84 = tpu.matmul %82, %83, %cst_63 {dimension_numbers = #tpu.dot_dimension_numbers<[1], [0], [0], [1], [0, 0, 1, 1], [], []>} : vector<4x2xf32>, vector<2x128xf32>, vector<4x128xf32> -> vector<4x128xf32>
      %85 = arith.addf %80, %84 : vector<4x128xf32>
      %c3_64 = arith.constant 3 : index
      %c0_65 = arith.constant 0 : index
      %c0_66 = arith.constant 0 : index
      %86 = vector.load %arg7[%c3_64, %c0_65, %c0_66] : memref<9x4x2xf32, #tpu.memory_space<vmem>>, vector<1x4x2xf32>
      %87 = vector.shape_cast %86 : vector<1x4x2xf32> to vector<4x2xf32>
      %88 = vector.extract_strided_slice %69 {offsets = [0, 384], sizes = [2, 128], strides = [1, 1]} : vector<2x1152xf32> to vector<2x128xf32>
      %cst_67 = arith.constant dense<0.000000e+00> : vector<4x128xf32>
      %89 = tpu.matmul %87, %88, %cst_67 {dimension_numbers = #tpu.dot_dimension_numbers<[1], [0], [0], [1], [0, 0, 1, 1], [], []>} : vector<4x2xf32>, vector<2x128xf32>, vector<4x128xf32> -> vector<4x128xf32>
      %90 = arith.addf %85, %89 : vector<4x128xf32>
      %c4_68 = arith.constant 4 : index
      %c0_69 = arith.constant 0 : index
      %c0_70 = arith.constant 0 : index
      %91 = vector.load %arg7[%c4_68, %c0_69, %c0_70] : memref<9x4x2xf32, #tpu.memory_space<vmem>>, vector<1x4x2xf32>
      %92 = vector.shape_cast %91 : vector<1x4x2xf32> to vector<4x2xf32>
      %93 = vector.extract_strided_slice %69 {offsets = [0, 512], sizes = [2, 128], strides = [1, 1]} : vector<2x1152xf32> to vector<2x128xf32>
      %cst_71 = arith.constant dense<0.000000e+00> : vector<4x128xf32>
      %94 = tpu.matmul %92, %93, %cst_71 {dimension_numbers = #tpu.dot_dimension_numbers<[1], [0], [0], [1], [0, 0, 1, 1], [], []>} : vector<4x2xf32>, vector<2x128xf32>, vector<4x128xf32> -> vector<4x128xf32>
      %95 = arith.addf %90, %94 : vector<4x128xf32>
      %c5_72 = arith.constant 5 : index
      %c0_73 = arith.constant 0 : index
      %c0_74 = arith.constant 0 : index
      %96 = vector.load %arg7[%c5_72, %c0_73, %c0_74] : memref<9x4x2xf32, #tpu.memory_space<vmem>>, vector<1x4x2xf32>
      %97 = vector.shape_cast %96 : vector<1x4x2xf32> to vector<4x2xf32>
      %98 = vector.extract_strided_slice %69 {offsets = [0, 640], sizes = [2, 128], strides = [1, 1]} : vector<2x1152xf32> to vector<2x128xf32>
      %cst_75 = arith.constant dense<0.000000e+00> : vector<4x128xf32>
      %99 = tpu.matmul %97, %98, %cst_75 {dimension_numbers = #tpu.dot_dimension_numbers<[1], [0], [0], [1], [0, 0, 1, 1], [], []>} : vector<4x2xf32>, vector<2x128xf32>, vector<4x128xf32> -> vector<4x128xf32>
      %100 = arith.addf %95, %99 : vector<4x128xf32>
      %c6_76 = arith.constant 6 : index
      %c0_77 = arith.constant 0 : index
      %c0_78 = arith.constant 0 : index
      %101 = vector.load %arg7[%c6_76, %c0_77, %c0_78] : memref<9x4x2xf32, #tpu.memory_space<vmem>>, vector<1x4x2xf32>
      %102 = vector.shape_cast %101 : vector<1x4x2xf32> to vector<4x2xf32>
      %103 = vector.extract_strided_slice %69 {offsets = [0, 768], sizes = [2, 128], strides = [1, 1]} : vector<2x1152xf32> to vector<2x128xf32>
      %cst_79 = arith.constant dense<0.000000e+00> : vector<4x128xf32>
      %104 = tpu.matmul %102, %103, %cst_79 {dimension_numbers = #tpu.dot_dimension_numbers<[1], [0], [0], [1], [0, 0, 1, 1], [], []>} : vector<4x2xf32>, vector<2x128xf32>, vector<4x128xf32> -> vector<4x128xf32>
      %105 = arith.addf %100, %104 : vector<4x128xf32>
      %c7_80 = arith.constant 7 : index
      %c0_81 = arith.constant 0 : index
      %c0_82 = arith.constant 0 : index
      %106 = vector.load %arg7[%c7_80, %c0_81, %c0_82] : memref<9x4x2xf32, #tpu.memory_space<vmem>>, vector<1x4x2xf32>
      %107 = vector.shape_cast %106 : vector<1x4x2xf32> to vector<4x2xf32>
      %108 = vector.extract_strided_slice %69 {offsets = [0, 896], sizes = [2, 128], strides = [1, 1]} : vector<2x1152xf32> to vector<2x128xf32>
      %cst_83 = arith.constant dense<0.000000e+00> : vector<4x128xf32>
      %109 = tpu.matmul %107, %108, %cst_83 {dimension_numbers = #tpu.dot_dimension_numbers<[1], [0], [0], [1], [0, 0, 1, 1], [], []>} : vector<4x2xf32>, vector<2x128xf32>, vector<4x128xf32> -> vector<4x128xf32>
      %110 = arith.addf %105, %109 : vector<4x128xf32>
      %c8_84 = arith.constant 8 : index
      %c0_85 = arith.constant 0 : index
      %c0_86 = arith.constant 0 : index
      %111 = vector.load %arg7[%c8_84, %c0_85, %c0_86] : memref<9x4x2xf32, #tpu.memory_space<vmem>>, vector<1x4x2xf32>
      %112 = vector.shape_cast %111 : vector<1x4x2xf32> to vector<4x2xf32>
      %113 = vector.extract_strided_slice %69 {offsets = [0, 1024], sizes = [2, 128], strides = [1, 1]} : vector<2x1152xf32> to vector<2x128xf32>
      %cst_87 = arith.constant dense<0.000000e+00> : vector<4x128xf32>
      %114 = tpu.matmul %112, %113, %cst_87 {dimension_numbers = #tpu.dot_dimension_numbers<[1], [0], [0], [1], [0, 0, 1, 1], [], []>} : vector<4x2xf32>, vector<2x128xf32>, vector<4x128xf32> -> vector<4x128xf32>
      %115 = arith.addf %110, %114 : vector<4x128xf32>
      %116 = vector.extract_strided_slice %115 {offsets = [0, 0], sizes = [4, 100], strides = [1, 1]} : vector<4x128xf32> to vector<4x100xf32>
      %117 = vector.broadcast %68 : vector<4x1xf32> to vector<4x100xf32>
      %118 = arith.addf %116, %117 : vector<4x100xf32>
      %c0_88 = arith.constant 0 : index
      %c0_89 = arith.constant 0 : index
      %c0_90 = arith.constant 0 : index
      %119 = vector.load %arg9[%c0_88, %c0_89, %c0_90] : memref<1x4x100xf32, #tpu.memory_space<vmem>>, vector<1x4x100xf32>
      %120 = vector.shape_cast %119 : vector<1x4x100xf32> to vector<4x100xf32>
      %121 = vector.shape_cast %118 : vector<4x100xf32> to vector<1x4x100xf32>
      tpu.vector_store %arg9[%c0_88, %c0_89, %c0_90], %121 {strides = array<i32>} : memref<1x4x100xf32, #tpu.memory_space<vmem>>, vector<1x4x100xf32>,
    } else {
    }
    return
  }
  func.func @transform_0(%arg0: i32, %arg1: i32) -> (i32, i32, i32) {
    %c0_i32 = arith.constant 0 : i32
    %c0_i32_0 = arith.constant 0 : i32
    return %arg0, %c0_i32, %arg1 : i32, i32, i32
  }
  func.func @transform_1(%arg0: i32, %arg1: i32) -> (i32, i32) {
    %c0_i32 = arith.constant 0 : i32
    %c0_i32_0 = arith.constant 0 : i32
    return %arg1, %c0_i32 : i32, i32
  }
  func.func @transform_2(%arg0: i32, %arg1: i32) -> (i32, i32) {
    %c0_i32 = arith.constant 0 : i32
    %c0_i32_0 = arith.constant 0 : i32
    %c0_i32_1 = arith.constant 0 : i32
    return %c0_i32, %c0_i32_0 : i32, i32
  }
  func.func @transform_3(%arg0: i32, %arg1: i32) -> (i32, i32, i32) {
    %c0_i32 = arith.constant 0 : i32
    %c0_i32_0 = arith.constant 0 : i32
    %c0_i32_1 = arith.constant 0 : i32
    %c0_i32_2 = arith.constant 0 : i32
    return %c0_i32, %c0_i32_0, %c0_i32_1 : i32, i32, i32
  }
  func.func @transform_4(%arg0: i32, %arg1: i32) -> (i32, i32) {
    %c0_i32 = arith.constant 0 : i32
    %c0_i32_0 = arith.constant 0 : i32
    %c0_i32_1 = arith.constant 0 : i32
    return %c0_i32, %c0_i32_0 : i32, i32
  }
  func.func @transform_5(%arg0: i32, %arg1: i32) -> (i32, i32, i32) {
    %c0_i32 = arith.constant 0 : i32
    %c0_i32_0 = arith.constant 0 : i32
    %c0_i32_1 = arith.constant 0 : i32
    %c0_i32_2 = arith.constant 0 : i32
    return %c0_i32, %c0_i32_0, %c0_i32_1 : i32, i32, i32
  }
  func.func @transform_6(%arg0: i32, %arg1: i32) -> (i32, i32) {
    %c0_i32 = arith.constant 0 : i32
    %c0_i32_0 = arith.constant 0 : i32
    %c0_i32_1 = arith.constant 0 : i32
    return %c0_i32, %c0_i32_0 : i32, i32
  }
  func.func @transform_7(%arg0: i32, %arg1: i32) -> (i32, i32, i32) {
    %c0_i32 = arith.constant 0 : i32
    %c0_i32_0 = arith.constant 0 : i32
    %c0_i32_1 = arith.constant 0 : i32
    return %arg0, %c0_i32, %c0_i32_0 : i32, i32, i32
  }
}

</mosaic_0001>

<llo_original>
// kernel: channel_attention_spatial_level.3
$region0: #{channel_attention_spatial_level.3}
  #allocation0 [shape = 'u32[]', space=smem, size = 0x4, offset = 0x4, fixed_abs, tag = 'smem constant byte address 0x4 - core index']
  #allocation1 [shape = 'u32[72,128]{1,0:T(1,128)}', space=vmem, size = 0x9000, scoped, tag = 'internal scratch']
  %s0 = inlined_call_operand.vmem [shape: f32[2,4,100], index: 0, kind: input, shape index: {}]
  %s1 = inlined_call_operand.vmem [shape: f32[2,4,256], index: 1, kind: input, shape index: {}]
  %s2 = inlined_call_operand.vmem [shape: f32[100,256], index: 2, kind: input, shape index: {}]
  %s3 = inlined_call_operand.vmem [shape: f32[2,4,256], index: 3, kind: output, shape index: {}]
  %s4 = sld [smem:[#allocation0]]
  $region45: #{channel_attention_spatial_level.3} parent=0
    _
  %s6 = ssub.s32 1, %s4
  %s7 = scalar_select 0, %s6, %s4
  loop: start=0, step=1, limit=4
  $region2: #{channel_attention_spatial_level.3} parent=0 // loop_pre_header
    _
  $region3: #{channel_attention_spatial_level.3} parent=0 // loop_header
    %s9 = sphi 0, %s13
    %p10 = scmp.ge.s32.totalorder %s9, 4
    %s16 = sphi 0, %s28
    %s17 = sphi 0, %s24
    %s18 = sphi 0, %s16
    %s19 = sphi 0, %s17
    %s20 = sphi 0, %s18
    %s21 = sphi 0, %s19
    %s31 = sphi 0, %s33
    %s34 = sphi 0, %s31
    %s35 = sphi 0, %s34
    %s51 = sphi 0, %s35
    %s59 = sphi 0, %s61
    %s62 = sphi 0, %s59
    %s63 = sphi 0, %s62
    %s79 = sphi 0, %s63
    %s85 = sphi 0, %s87
    %s88 = sphi 0, %s85
    %s89 = sphi 0, %s88
    %s105 = sphi 0, %s89
    %s113 = sphi 0, %s115
    %s116 = sphi 0, %s113
    %s117 = sphi 0, %s116
    %s133 = sphi 0, %s117
  $region4: #{channel_attention_spatial_level.3} parent=0 // loop_header_branch
    %12 = sbr.rel (%p10) target = $region8
  $region5: #{channel_attention_spatial_level.3} parent=0 // loop_body
    %s14 = ssub.s32 %s9, 1
    %s15 = ssub.s32 %s9, 2
    %s22 = sadd.s32 1, %s17
    %p23 = scmp.ge.s32.totalorder %s22, 1
    %s24 = scalar_select %p23, 0, %s22
    %s25 = sadd.s32 1, %s16
    %s26 = scalar_select %p23, %s25, %s16
    %p27 = scmp.ge.s32.totalorder %s26, 2
    %s28 = scalar_select %p27, 0, %s26
    %s29 = ssub.s32 %s16, %s28
    %p30 = scmp.eq.s32.totalorder %s29, 0
    %s32 = sadd.s32 %s31, 1
    %s33 = scalar_select %p30, %s31, %s32
    %p36 = pneg %p30
    %p37 = scmp.eq.s32.totalorder %s9, 1
    %p38 = por %p36, %p37
    %p39 = scmp.ne.s32.totalorder %s31, %s34
    %p40 = scmp.eq.s32.totalorder %s9, 0
    %p41 = por %p39, %p40
    %p42 = scmp.ne.s32.totalorder %s31, %s34
    %p43 = scmp.eq.s32.totalorder %s14, 1
    %p44 = por %p42, %p43
    %p45 = scmp.ne.s32.totalorder %s34, %s35
    %p46 = scmp.eq.s32.totalorder %s14, 0
    %p47 = por %p45, %p46
    %p48 = scmp.ne.s32.totalorder %s34, %s35
    %p49 = scmp.eq.s32.totalorder %s15, 1
    %p50 = por %p48, %p49
    %p52 = scmp.ne.s32.totalorder %s35, %s51
    %p53 = scmp.eq.s32.totalorder %s15, 0
    %p54 = por %p52, %p53
    %s55 = ssub.s32 %s16, %s28
    %s56 = ssub.s32 %s17, %s24
    %s57 = sor.u32 %s55, %s56
    %p58 = scmp.eq.s32.totalorder %s57, 0
    %s60 = sadd.s32 %s59, 1
    %s61 = scalar_select %p58, %s59, %s60
    %p64 = pneg %p58
    %p65 = scmp.eq.s32.totalorder %s9, 1
    %p66 = por %p64, %p65
    %p67 = scmp.ne.s32.totalorder %s59, %s62
    %p68 = scmp.eq.s32.totalorder %s9, 0
    %p69 = por %p67, %p68
    %p70 = scmp.ne.s32.totalorder %s59, %s62
    %p71 = scmp.eq.s32.totalorder %s14, 1
    %p72 = por %p70, %p71
    %p73 = scmp.ne.s32.totalorder %s62, %s63
    %p74 = scmp.eq.s32.totalorder %s14, 0
    %p75 = por %p73, %p74
    %p76 = scmp.ne.s32.totalorder %s62, %s63
    %p77 = scmp.eq.s32.totalorder %s15, 1
    %p78 = por %p76, %p77
    %p80 = scmp.ne.s32.totalorder %s63, %s79
    %p81 = scmp.eq.s32.totalorder %s15, 0
    %p82 = por %p80, %p81
    %s83 = ssub.s32 %s17, %s24
    %p84 = scmp.eq.s32.totalorder %s83, 0
    %s86 = sadd.s32 %s85, 1
    %s87 = scalar_select %p84, %s85, %s86
    %p90 = pneg %p84
    %p91 = scmp.eq.s32.totalorder %s9, 1
    %p92 = por %p90, %p91
    %p93 = scmp.ne.s32.totalorder %s85, %s88
    %p94 = scmp.eq.s32.totalorder %s9, 0
    %p95 = por %p93, %p94
    %p96 = scmp.ne.s32.totalorder %s85, %s88
    %p97 = scmp.eq.s32.totalorder %s14, 1
    %p98 = por %p96, %p97
    %p99 = scmp.ne.s32.totalorder %s88, %s89
    %p100 = scmp.eq.s32.totalorder %s14, 0
    %p101 = por %p99, %p100
    %p102 = scmp.ne.s32.totalorder %s88, %s89
    %p103 = scmp.eq.s32.totalorder %s15, 1
    %p104 = por %p102, %p103
    %p106 = scmp.ne.s32.totalorder %s89, %s105
    %p107 = scmp.eq.s32.totalorder %s15, 0
    %p108 = por %p106, %p107
    %s109 = ssub.s32 %s16, %s28
    %s110 = ssub.s32 %s17, %s24
    %s111 = sor.u32 %s109, %s110
    %p112 = scmp.eq.s32.totalorder %s111, 0
    %s114 = sadd.s32 %s113, 1
    %s115 = scalar_select %p112, %s113, %s114
    %p118 = pneg %p112
    %p119 = scmp.eq.s32.totalorder %s9, 1
    %p120 = por %p118, %p119
    %p121 = scmp.ne.s32.totalorder %s113, %s116
    %p122 = scmp.eq.s32.totalorder %s9, 0
    %p123 = por %p121, %p122
    %p124 = scmp.ne.s32.totalorder %s113, %s116
    %p125 = scmp.eq.s32.totalorder %s14, 1
    %p126 = por %p124, %p125
    %p127 = scmp.ne.s32.totalorder %s116, %s117
    %p128 = scmp.eq.s32.totalorder %s14, 0
    %p129 = por %p127, %p128
    %p130 = scmp.ne.s32.totalorder %s116, %s117
    %p131 = scmp.eq.s32.totalorder %s15, 1
    %p132 = por %p130, %p131
    %p134 = scmp.ne.s32.totalorder %s117, %s133
    %p135 = scmp.eq.s32.totalorder %s15, 0
    %p136 = por %p134, %p135
    %p137 = scmp.le.s32.totalorder 1, %s9
    %p138 = scmp.lt.s32.totalorder %s9, 3
    %p139 = pnand %p137, %p138
    %p140 = pneg %p139
    // Predicated region
    $region9: #{channel_attention_spatial_level.3} parent=5 // pred_check
      _
    $region10: #{channel_attention_spatial_level.3} parent=5 // pred_check_branch
      %142 = sbr.rel (%p139) target = $region12
    $region11: #{channel_attention_spatial_level.3} parent=5 // pred_region
      %s143 = ssub.s32 %s9, 1
      // Predicated region
      $region13: #{channel_attention_spatial_level.3} parent=11 // pred_check
        %p144 = pneg %p101
      $region14: #{channel_attention_spatial_level.3} parent=11 // pred_check_branch
        %146 = sbr.rel (%p144) target = $region16
      $region15: #{channel_attention_spatial_level.3} parent=11 // pred_region
        %s147 = smul.u32 2, %s19
        %p148 = scmp.lt.s32.totalorder %s147, 1
        %s149 = scalar_select %p148, %s147, 1
        %s150 = smul.addr %s149, 8
        %s151 = scalar_lea.vmem %s2, %s150
        %s152 = smul.u32 2, %s19
      $region16: #{channel_attention_spatial_level.3} parent=11 // pred_fallthru
        _
    $region12: #{channel_attention_spatial_level.3} parent=5 // pred_fallthru
      _
    %p153 = scmp.lt.s32.totalorder %s9, 2
    // Predicated region
    $region17: #{channel_attention_spatial_level.3} parent=5 // pred_check
      %p154 = pneg %p153
    $region18: #{channel_attention_spatial_level.3} parent=5 // pred_check_branch
      %156 = sbr.rel (%p154) target = $region20
    $region19: #{channel_attention_spatial_level.3} parent=5 // pred_region
      // Predicated region
      $region21: #{channel_attention_spatial_level.3} parent=19 // pred_check
        %p157 = pneg %p41
      $region22: #{channel_attention_spatial_level.3} parent=19 // pred_check_branch
        %159 = sbr.rel (%p157) target = $region24
      $region23: #{channel_attention_spatial_level.3} parent=19 // pred_region
        %p160 = scmp.lt.s32.totalorder %s16, 1
        %s161 = scalar_select %p160, %s16, 1
        %s162 = smul.addr %s161, 4
        %s163 = scalar_lea.vmem %s0, %s162
      $region24: #{channel_attention_spatial_level.3} parent=19 // pred_fallthru
        _
      // Predicated region
      $region25: #{channel_attention_spatial_level.3} parent=19 // pred_check
        %p164 = pneg %p69
      $region26: #{channel_attention_spatial_level.3} parent=19 // pred_check_branch
        %166 = sbr.rel (%p164) target = $region28
      $region27: #{channel_attention_spatial_level.3} parent=19 // pred_region
        %s167 = smul.u32 2, %s17
        %p168 = scmp.lt.s32.totalorder %s16, 1
        %s169 = scalar_select %p168, %s16, 1
        %p170 = scmp.lt.s32.totalorder %s167, 1
        %s171 = scalar_select %p170, %s167, 1
        %s172 = smul.addr %s169, 2
        %s173 = sadd.s32 %s171, %s172
        %s174 = smul.addr %s173, 4
        %s175 = scalar_lea.vmem %s1, %s174
        %s176 = smul.u32 2, %s17
      $region28: #{channel_attention_spatial_level.3} parent=19 // pred_fallthru
        _
    $region20: #{channel_attention_spatial_level.3} parent=5 // pred_fallthru
      _
    %p177 = scmp.le.s32.totalorder 1, %s9
    %p178 = scmp.lt.s32.totalorder %s9, 3
    %p179 = pnand %p177, %p178
    %p180 = pneg %p179
    // Predicated region
    $region29: #{channel_attention_spatial_level.3} parent=5 // pred_check
      _
    $region30: #{channel_attention_spatial_level.3} parent=5 // pred_check_branch
      %182 = sbr.rel (%p179) target = $region32
    $region31: #{channel_attention_spatial_level.3} parent=5 // pred_region
      %s183 = ssub.s32 %s9, 1
      %p184 = scmp.lt.s32.totalorder %s18, 1
      %s185 = scalar_select %p184, %s18, 1
      %s186 = smul.addr %s185, 4
      %s187 = scalar_lea.vmem %s0, %s186
      %p188 = pneg %p47
      %p189 = pneg %p44
      %s190 = smul.u32 2, %s19
      %p191 = scmp.lt.s32.totalorder %s18, 1
      %s192 = scalar_select %p191, %s18, 1
      %p193 = scmp.lt.s32.totalorder %s190, 1
      %s194 = scalar_select %p193, %s190, 1
      %s195 = smul.addr %s192, 2
      %s196 = sadd.s32 %s194, %s195
      %s197 = smul.addr %s196, 4
      %s198 = scalar_lea.vmem %s1, %s197
      %p199 = pneg %p75
      %p200 = pneg %p72
      %s201 = smul.u32 2, %s19
      %p202 = scmp.lt.s32.totalorder %s201, 1
      %s203 = scalar_select %p202, %s201, 1
      %s204 = smul.addr %s203, 8
      %s205 = scalar_lea.vmem %s2, %s204
      %p206 = pneg %p101
      %p207 = pneg %p98
      %p208 = pneg %p129
      %p209 = pneg %p126
      %s210 = smul.u32 2, %s19
      %p211 = scmp.lt.s32.totalorder %s18, 1
      %s212 = scalar_select %p211, %s18, 1
      %p213 = scmp.lt.s32.totalorder %s210, 1
      %s214 = scalar_select %p213, %s210, 1
      %s215 = smul.addr %s212, 2
      %s216 = sadd.s32 %s214, %s215
      %s217 = smul.addr %s216, 4
      %s218 = scalar_lea.vmem %s3, %s217
      %p219 = scmp.lt.s32.totalorder %s18, 1
      %s220 = scalar_select %p219, %s18, 1
      %s221 = smul.addr %s220, 4
      %s222 = scalar_lea.vmem %s0, %s221
      %s223 = smul.u32 2, %s19
      %p224 = scmp.lt.s32.totalorder %s18, 1
      %s225 = scalar_select %p224, %s18, 1
      %p226 = scmp.lt.s32.totalorder %s223, 1
      %s227 = scalar_select %p226, %s223, 1
      %s228 = smul.addr %s225, 2
      %s229 = sadd.s32 %s227, %s228
      %s230 = smul.addr %s229, 4
      %s231 = scalar_lea.vmem %s1, %s230
      %s232 = smul.u32 2, %s19
      %s233 = smul.u32 2, %s19
      %p234 = scmp.lt.s32.totalorder %s233, 1
      %s235 = scalar_select %p234, %s233, 1
      %s236 = smul.addr %s235, 8
      %s237 = scalar_lea.vmem %s2, %s236
      %s238 = smul.u32 2, %s19
      %s239 = smul.u32 2, %s19
      %p240 = scmp.lt.s32.totalorder %s18, 1
      %s241 = scalar_select %p240, %s18, 1
      %p242 = scmp.lt.s32.totalorder %s239, 1
      %s243 = scalar_select %p242, %s239, 1
      %s244 = smul.addr %s241, 2
      %s245 = sadd.s32 %s243, %s244
      %s246 = smul.addr %s245, 4
      %s247 = scalar_lea.vmem %s3, %s246
      %s248 = smul.u32 2, %s19
      %v249 = vld [vmem:[%s231] sm:$0xff]
      %v250 = vld [vmem:[%s222] sm:$0xf]
      %v251 = vld [vmem:[%s237] sm:$0xff]
      %v252 = vld [vmem:[%s237 + $0x8] sm:$0xff]
      %v253 = vld [vmem:[%s237 + $0x10] sm:$0xff]
      %v254 = vld [vmem:[%s237 + $0x18] sm:$0xff]
      %v255 = vld [vmem:[%s237 + $0x20] sm:$0xff]
      %v256 = vld [vmem:[%s237 + $0x28] sm:$0xff]
      %v257 = vld [vmem:[%s237 + $0x30] sm:$0xff]
      %v258 = vld [vmem:[%s237 + $0x38] sm:$0xff]
      %v259 = vld [vmem:[%s237 + $0x40] sm:$0xff]
      %v260 = vld [vmem:[%s237 + $0x48] sm:$0xff]
      %v261 = vld [vmem:[%s237 + $0x50] sm:$0xff]
      %v262 = vld [vmem:[%s237 + $0x58] sm:$0xff]
      %v263 = vld [vmem:[%s237 + $0x60] sm:$0xff]
      %v264 = vld [vmem:[%s237 + $0x68] sm:$0xff]
      %v265 = vld [vmem:[%s237 + $0x70] sm:$0xff]
      %v266 = vld [vmem:[%s237 + $0x78] sm:$0xff]
      %v267 = vld [vmem:[%s237 + $0x80] sm:$0xff]
      %v268 = vld [vmem:[%s237 + $0x88] sm:$0xff]
      %v269 = vld [vmem:[%s237 + $0x90] sm:$0xff]
      %v270 = vld [vmem:[%s237 + $0x98] sm:$0xff]
      %v271 = vld [vmem:[%s237 + $0xa0] sm:$0xff]
      %v272 = vld [vmem:[%s237 + $0xa8] sm:$0xff]
      %v273 = vld [vmem:[%s237 + $0xb0] sm:$0xff]
      %v274 = vld [vmem:[%s237 + $0xb8] sm:$0xff]
      %v275 = vld [vmem:[%s237 + $0xc0] sm:$0xf]
      %v276 = vld [vmem:[%s237 + $0xc8] sm:$0xf]
      %vm277 = vcmask 818176
      %v279 = vsel %vm277, %v250, 0
      %vm281 = vcmask 1043456
      %v283 = vsel %vm281, %v275, 0
      %v286 = vsel %vm281, %v276, 0
      %288 = vmatpush.msra.mxu0 0.0
      %289 = vmatpush.msra.mxu0 0.0
      %290 = vmatpush.msra.mxu0 0.0
      %291 = vmatpush.msra.mxu0 %v283
      %292 = vmatpush.msra.mxu0 %v273
      %293 = vmatpush.msra.mxu0 %v271
      %294 = vmatpush.msra.mxu0 %v269
      %295 = vmatpush.msra.mxu0 %v267
      %296 = vmatpush.msra.mxu0 %v265
      %297 = vmatpush.msra.mxu0 %v263
      %298 = vmatpush.msra.mxu0 %v261
      %299 = vmatpush.msra.mxu0 %v259
      %300 = vmatpush.msra.mxu0 %v257
      %301 = vmatpush.msra.mxu0 %v255
      %302 = vmatpush.msra.mxu0 %v253
      %303 = vmatpush.msra.mxu0 %v251
      %304 = vmatmul.f32.gmra.mxu0 %v279
      %v305 = vpop.f32.mrf.mxu0
      %v306 = vadd.f32 0.0, %v305
      %307 = vdwg.mxu0
      %308 = vmatpush.msra.mxu0 0.0
      %309 = vmatpush.msra.mxu0 0.0
      %310 = vmatpush.msra.mxu0 0.0
      %311 = vmatpush.msra.mxu0 %v286
      %312 = vmatpush.msra.mxu0 %v274
      %313 = vmatpush.msra.mxu0 %v272
      %314 = vmatpush.msra.mxu0 %v270
      %315 = vmatpush.msra.mxu0 %v268
      %316 = vmatpush.msra.mxu0 %v266
      %317 = vmatpush.msra.mxu0 %v264
      %318 = vmatpush.msra.mxu0 %v262
      %319 = vmatpush.msra.mxu0 %v260
      %320 = vmatpush.msra.mxu0 %v258
      %321 = vmatpush.msra.mxu0 %v256
      %322 = vmatpush.msra.mxu0 %v254
      %323 = vmatpush.msra.mxu0 %v252
      %324 = vmatmul.f32.gmra.mxu0 %v279
      %v325 = vpop.f32.mrf.mxu0
      %v326 = vadd.f32 0.0, %v325
      %327 = vdwg.mxu0
      %v330 = vrot.slane %v326, 4
      %v331 = vsel %vm281, %v306, %v330
      %v333 = vmul.f32 %v249, %v331
      %v334 = vadd.f32 %v333, %v249
      %335 = vst [vmem:[%s247] sm:$0xff] %v334
      %s336 = smul.u32 2, %s19
      %p337 = scmp.lt.s32.totalorder %s18, 1
      %s338 = scalar_select %p337, %s18, 1
      %p339 = scmp.lt.s32.totalorder %s336, 1
      %s340 = scalar_select %p339, %s336, 1
      %s341 = smul.addr %s338, 2
      %s342 = sadd.s32 %s340, %s341
      %s343 = smul.addr %s342, 4
      %s344 = scalar_lea.vmem %s3, %s343
      // Predicated region
      $region33: #{channel_attention_spatial_level.3} parent=31 // pred_check
        %p345 = pneg %p126
      $region34: #{channel_attention_spatial_level.3} parent=31 // pred_check_branch
        %347 = sbr.rel (%p345) target = $region36
      $region35: #{channel_attention_spatial_level.3} parent=31 // pred_region
        %s348 = smul.u32 2, %s19
      $region36: #{channel_attention_spatial_level.3} parent=31 // pred_fallthru
        _
    $region32: #{channel_attention_spatial_level.3} parent=5 // pred_fallthru
      _
    %p349 = scmp.le.s32.totalorder 2, %s9
    // Predicated region
    $region37: #{channel_attention_spatial_level.3} parent=5 // pred_check
      %p350 = pneg %p349
    $region38: #{channel_attention_spatial_level.3} parent=5 // pred_check_branch
      %352 = sbr.rel (%p350) target = $region40
    $region39: #{channel_attention_spatial_level.3} parent=5 // pred_region
      %s353 = ssub.s32 %s9, 2
      // Predicated region
      $region41: #{channel_attention_spatial_level.3} parent=39 // pred_check
        %p354 = pneg %p132
      $region42: #{channel_attention_spatial_level.3} parent=39 // pred_check_branch
        %356 = sbr.rel (%p354) target = $region44
      $region43: #{channel_attention_spatial_level.3} parent=39 // pred_region
        %s357 = smul.u32 2, %s21
        %p358 = scmp.lt.s32.totalorder %s20, 1
        %s359 = scalar_select %p358, %s20, 1
        %p360 = scmp.lt.s32.totalorder %s357, 1
        %s361 = scalar_select %p360, %s357, 1
        %s362 = smul.addr %s359, 2
        %s363 = sadd.s32 %s361, %s362
        %s364 = smul.addr %s363, 4
        %s365 = scalar_lea.vmem %s3, %s364
      $region44: #{channel_attention_spatial_level.3} parent=39 // pred_fallthru
        _
    $region40: #{channel_attention_spatial_level.3} parent=5 // pred_fallthru
      _
  $region6: #{channel_attention_spatial_level.3} parent=0 // loop_footer
    %s13 = sadd.s32 1, %s9
  $region7: #{channel_attention_spatial_level.3} parent=0 // loop_footer_branch
    %8 = sbr.rel target = $region3
  $region8: #{channel_attention_spatial_level.3} parent=0 // loop_exit
    _

// kernel: channel_attention_spatial_level.2
$region0: #{channel_attention_spatial_level.2}
  #allocation0 [shape = 'u32[]', space=smem, size = 0x4, offset = 0x4, fixed_abs, tag = 'smem constant byte address 0x4 - core index']
  #allocation1 [shape = 'u32[72,128]{1,0:T(1,128)}', space=vmem, size = 0x9000, scoped, tag = 'internal scratch']
  #allocation2 [shape = 'f32[4,100]{1,0:T(4,128)}', space=vmem, size = 0x800, scoped, tag = 'scratch operand']
  %s0 = inlined_call_operand.vmem [shape: f32[2,4,256], index: 0, kind: input, shape index: {}]
  %s1 = inlined_call_operand.hbm [shape: f32[256,100], index: 1, kind: input, shape index: {}]
  %s2 = inlined_call_operand.hbm [shape: f32[100,1152], index: 2, kind: input, shape index: {}]
  %s3 = inlined_call_operand.vmem [shape: f32[9,2,4], index: 3, kind: input, shape index: {}]
  %s4 = inlined_call_operand.vmem [shape: f32[2,1], index: 4, kind: input, shape index: {}]
  %s5 = inlined_call_operand.vmem [shape: f32[9,4,2], index: 5, kind: input, shape index: {}]
  %s6 = inlined_call_operand.vmem [shape: f32[4,1], index: 6, kind: input, shape index: {}]
  %s7 = inlined_call_operand.vmem [shape: f32[2,4,100], index: 7, kind: output, shape index: {}]
  %s8 = sld [smem:[#allocation0]]
  $region77: #{channel_attention_spatial_level.2} parent=0
    _
  %s10 = ssub.s32 1, %s8
  %s11 = scalar_select 0, %s10, %s8
  $region1: #{channel_attention_spatial_level.2} parent=0
    #allocation3 [shape = 'u8[131072]{0}', space=vmem, size = 0x20000, scoped, tag = 'input window, operand 1, single buffered']
    #allocation4 [shape = 's32[2]{0}', space=sflag, size = 0x8, scoped, tag = 'scoped memory for channel_attention_spatial_level.2']
    #allocation5 [shape = 'u8[479232]{0}', space=vmem, size = 0x75000, scoped, tag = 'input window, operand 2, single buffered']
    #allocation6 [shape = 's32[1]{0}', space=sflag, size = 0x4, scoped, tag = 'scoped memory for channel_attention_spatial_level.2']
    %12 = vsyncpa [#allocation4], 0
    %13 = vsyncpa [#allocation6], 0
    loop: start=0, step=1, limit=4
    $region2: #{channel_attention_spatial_level.2} parent=1 // loop_pre_header
      _
    $region3: #{channel_attention_spatial_level.2} parent=1 // loop_header
      %s15 = sphi 0, %s19
      %p16 = scmp.ge.s32.totalorder %s15, 4
      %s22 = sphi 0, %s34
      %s23 = sphi 0, %s30
      %s24 = sphi 0, %s22
      %s25 = sphi 0, %s23
      %s26 = sphi 0, %s24
      %s27 = sphi 0, %s25
      %s39 = sphi 0, %s41
      %s42 = sphi 0, %s39
      %s43 = sphi 0, %s42
      %s59 = sphi 0, %s43
      %s65 = sphi 0, %s67
      %s68 = sphi 0, %s65
      %s69 = sphi 0, %s68
      %s85 = sphi 0, %s69
      %s89 = sphi 0, %s89
      %s91 = sphi 0, %s89
      %s92 = sphi 0, %s91
      %s106 = sphi 0, %s92
      %s110 = sphi 0, %s110
      %s112 = sphi 0, %s110
      %s113 = sphi 0, %s112
      %s127 = sphi 0, %s113
      %s131 = sphi 0, %s131
      %s133 = sphi 0, %s131
      %s134 = sphi 0, %s133
      %s148 = sphi 0, %s134
      %s152 = sphi 0, %s152
      %s154 = sphi 0, %s152
      %s155 = sphi 0, %s154
      %s169 = sphi 0, %s155
      %s173 = sphi 0, %s173
      %s175 = sphi 0, %s173
      %s176 = sphi 0, %s175
      %s190 = sphi 0, %s176
      %s196 = sphi 0, %s198
      %s199 = sphi 0, %s196
      %s200 = sphi 0, %s199
      %s216 = sphi 0, %s200
    $region4: #{channel_attention_spatial_level.2} parent=1 // loop_header_branch
      %18 = sbr.rel (%p16) target = $region8
    $region5: #{channel_attention_spatial_level.2} parent=1 // loop_body
      %s20 = ssub.s32 %s15, 1
      %s21 = ssub.s32 %s15, 2
      %s28 = sadd.s32 1, %s23
      %p29 = scmp.ge.s32.totalorder %s28, 1
      %s30 = scalar_select %p29, 0, %s28
      %s31 = sadd.s32 1, %s22
      %s32 = scalar_select %p29, %s31, %s22
      %p33 = scmp.ge.s32.totalorder %s32, 2
      %s34 = scalar_select %p33, 0, %s32
      %s35 = ssub.s32 %s22, %s34
      %s36 = ssub.s32 %s23, %s30
      %s37 = sor.u32 %s35, %s36
      %p38 = scmp.eq.s32.totalorder %s37, 0
      %s40 = sadd.s32 %s39, 1
      %s41 = scalar_select %p38, %s39, %s40
      %p44 = pneg %p38
      %p45 = scmp.eq.s32.totalorder %s15, 1
      %p46 = por %p44, %p45
      %p47 = scmp.ne.s32.totalorder %s39, %s42
      %p48 = scmp.eq.s32.totalorder %s15, 0
      %p49 = por %p47, %p48
      %p50 = scmp.ne.s32.totalorder %s39, %s42
      %p51 = scmp.eq.s32.totalorder %s20, 1
      %p52 = por %p50, %p51
      %p53 = scmp.ne.s32.totalorder %s42, %s43
      %p54 = scmp.eq.s32.totalorder %s20, 0
      %p55 = por %p53, %p54
      %p56 = scmp.ne.s32.totalorder %s42, %s43
      %p57 = scmp.eq.s32.totalorder %s21, 1
      %p58 = por %p56, %p57
      %p60 = scmp.ne.s32.totalorder %s43, %s59
      %p61 = scmp.eq.s32.totalorder %s21, 0
      %p62 = por %p60, %p61
      %s63 = ssub.s32 %s23, %s30
      %p64 = scmp.eq.s32.totalorder %s63, 0
      %s66 = sadd.s32 %s65, 1
      %s67 = scalar_select %p64, %s65, %s66
      %p70 = pneg %p64
      %p71 = scmp.eq.s32.totalorder %s15, 1
      %p72 = por %p70, %p71
      %p73 = scmp.ne.s32.totalorder %s65, %s68
      %p74 = scmp.eq.s32.totalorder %s15, 0
      %p75 = por %p73, %p74
      %p76 = scmp.ne.s32.totalorder %s65, %s68
      %p77 = scmp.eq.s32.totalorder %s20, 1
      %p78 = por %p76, %p77
      %p79 = scmp.ne.s32.totalorder %s68, %s69
      %p80 = scmp.eq.s32.totalorder %s20, 0
      %p81 = por %p79, %p80
      %p82 = scmp.ne.s32.totalorder %s68, %s69
      %p83 = scmp.eq.s32.totalorder %s21, 1
      %p84 = por %p82, %p83
      %p86 = scmp.ne.s32.totalorder %s69, %s85
      %p87 = scmp.eq.s32.totalorder %s21, 0
      %p88 = por %p86, %p87
      %s90 = sadd.s32 %s89, 1
      %p93 = scmp.eq.s32.totalorder %s15, 1
      %p94 = scmp.ne.s32.totalorder %s89, %s91
      %p95 = scmp.eq.s32.totalorder %s15, 0
      %p96 = por %p94, %p95
      %p97 = scmp.ne.s32.totalorder %s89, %s91
      %p98 = scmp.eq.s32.totalorder %s20, 1
      %p99 = por %p97, %p98
      %p100 = scmp.ne.s32.totalorder %s91, %s92
      %p101 = scmp.eq.s32.totalorder %s20, 0
      %p102 = por %p100, %p101
      %p103 = scmp.ne.s32.totalorder %s91, %s92
      %p104 = scmp.eq.s32.totalorder %s21, 1
      %p105 = por %p103, %p104
      %p107 = scmp.ne.s32.totalorder %s92, %s106
      %p108 = scmp.eq.s32.totalorder %s21, 0
      %p109 = por %p107, %p108
      %s111 = sadd.s32 %s110, 1
      %p114 = scmp.eq.s32.totalorder %s15, 1
      %p115 = scmp.ne.s32.totalorder %s110, %s112
      %p116 = scmp.eq.s32.totalorder %s15, 0
      %p117 = por %p115, %p116
      %p118 = scmp.ne.s32.totalorder %s110, %s112
      %p119 = scmp.eq.s32.totalorder %s20, 1
      %p120 = por %p118, %p119
      %p121 = scmp.ne.s32.totalorder %s112, %s113
      %p122 = scmp.eq.s32.totalorder %s20, 0
      %p123 = por %p121, %p122
      %p124 = scmp.ne.s32.totalorder %s112, %s113
      %p125 = scmp.eq.s32.totalorder %s21, 1
      %p126 = por %p124, %p125
      %p128 = scmp.ne.s32.totalorder %s113, %s127
      %p129 = scmp.eq.s32.totalorder %s21, 0
      %p130 = por %p128, %p129
      %s132 = sadd.s32 %s131, 1
      %p135 = scmp.eq.s32.totalorder %s15, 1
      %p136 = scmp.ne.s32.totalorder %s131, %s133
      %p137 = scmp.eq.s32.totalorder %s15, 0
      %p138 = por %p136, %p137
      %p139 = scmp.ne.s32.totalorder %s131, %s133
      %p140 = scmp.eq.s32.totalorder %s20, 1
      %p141 = por %p139, %p140
      %p142 = scmp.ne.s32.totalorder %s133, %s134
      %p143 = scmp.eq.s32.totalorder %s20, 0
      %p144 = por %p142, %p143
      %p145 = scmp.ne.s32.totalorder %s133, %s134
      %p146 = scmp.eq.s32.totalorder %s21, 1
      %p147 = por %p145, %p146
      %p149 = scmp.ne.s32.totalorder %s134, %s148
      %p150 = scmp.eq.s32.totalorder %s21, 0
      %p151 = por %p149, %p150
      %s153 = sadd.s32 %s152, 1
      %p156 = scmp.eq.s32.totalorder %s15, 1
      %p157 = scmp.ne.s32.totalorder %s152, %s154
      %p158 = scmp.eq.s32.totalorder %s15, 0
      %p159 = por %p157, %p158
      %p160 = scmp.ne.s32.totalorder %s152, %s154
      %p161 = scmp.eq.s32.totalorder %s20, 1
      %p162 = por %p160, %p161
      %p163 = scmp.ne.s32.totalorder %s154, %s155
      %p164 = scmp.eq.s32.totalorder %s20, 0
      %p165 = por %p163, %p164
      %p166 = scmp.ne.s32.totalorder %s154, %s155
      %p167 = scmp.eq.s32.totalorder %s21, 1
      %p168 = por %p166, %p167
      %p170 = scmp.ne.s32.totalorder %s155, %s169
      %p171 = scmp.eq.s32.totalorder %s21, 0
      %p172 = por %p170, %p171
      %s174 = sadd.s32 %s173, 1
      %p177 = scmp.eq.s32.totalorder %s15, 1
      %p178 = scmp.ne.s32.totalorder %s173, %s175
      %p179 = scmp.eq.s32.totalorder %s15, 0
      %p180 = por %p178, %p179
      %p181 = scmp.ne.s32.totalorder %s173, %s175
      %p182 = scmp.eq.s32.totalorder %s20, 1
      %p183 = por %p181, %p182
      %p184 = scmp.ne.s32.totalorder %s175, %s176
      %p185 = scmp.eq.s32.totalorder %s20, 0
      %p186 = por %p184, %p185
      %p187 = scmp.ne.s32.totalorder %s175, %s176
      %p188 = scmp.eq.s32.totalorder %s21, 1
      %p189 = por %p187, %p188
      %p191 = scmp.ne.s32.totalorder %s176, %s190
      %p192 = scmp.eq.s32.totalorder %s21, 0
      %p193 = por %p191, %p192
      %s194 = ssub.s32 %s22, %s34
      %p195 = scmp.eq.s32.totalorder %s194, 0
      %s197 = sadd.s32 %s196, 1
      %s198 = scalar_select %p195, %s196, %s197
      %p201 = pneg %p195
      %p202 = scmp.eq.s32.totalorder %s15, 1
      %p203 = por %p201, %p202
      %p204 = scmp.ne.s32.totalorder %s196, %s199
      %p205 = scmp.eq.s32.totalorder %s15, 0
      %p206 = por %p204, %p205
      %p207 = scmp.ne.s32.totalorder %s196, %s199
      %p208 = scmp.eq.s32.totalorder %s20, 1
      %p209 = por %p207, %p208
      %p210 = scmp.ne.s32.totalorder %s199, %s200
      %p211 = scmp.eq.s32.totalorder %s20, 0
      %p212 = por %p210, %p211
      %p213 = scmp.ne.s32.totalorder %s199, %s200
      %p214 = scmp.eq.s32.totalorder %s21, 1
      %p215 = por %p213, %p214
      %p217 = scmp.ne.s32.totalorder %s200, %s216
      %p218 = scmp.eq.s32.totalorder %s21, 0
      %p219 = por %p217, %p218
      %p220 = scmp.le.s32.totalorder 1, %s15
      %p221 = scmp.lt.s32.totalorder %s15, 3
      %p222 = pnand %p220, %p221
      %p223 = pneg %p222
      // Predicated region
      $region9: #{channel_attention_spatial_level.2} parent=5 // pred_check
        _
      $region10: #{channel_attention_spatial_level.2} parent=5 // pred_check_branch
        %225 = sbr.rel (%p222) target = $region12
      $region11: #{channel_attention_spatial_level.2} parent=5 // pred_region
        %s226 = ssub.s32 %s15, 1
        // Predicated region
        $region13: #{channel_attention_spatial_level.2} parent=11 // pred_check
          %p227 = pneg %p81
        $region14: #{channel_attention_spatial_level.2} parent=11 // pred_check_branch
          %229 = sbr.rel (%p227) target = $region16
        $region15: #{channel_attention_spatial_level.2} parent=11 // pred_region
          %s230 = smul.u32 32, %s25
          %232 = vsyncadd [#allocation4], 0
          %s233 = smul.addr %s230, 8
          %s234 = scalar_lea.hbm %s1, %s233
          %s235 = sshll.u32 %s234, 4
          %s236 = int_to_ptr.hbm [resolvable:$true] %s235
          %s237 = sshll.u32 [#allocation3], 4
          %s238 = int_to_ptr.vmem [resolvable:$true] %s237
          %243 = dma.hbm_to_vmem [thread:$0]  %s236, 4096, %s238, [#allocation4], 128, 128, 8
        $region16: #{channel_attention_spatial_level.2} parent=11 // pred_fallthru
          _
        // Predicated region
        $region17: #{channel_attention_spatial_level.2} parent=11 // pred_check
          %p244 = pneg %p102
        $region18: #{channel_attention_spatial_level.2} parent=11 // pred_check_branch
          %246 = sbr.rel (%p244) target = $region20
        $region19: #{channel_attention_spatial_level.2} parent=11 // pred_region
          %248 = vsyncadd [#allocation6], 0
          %s249 = sshll.u32 %s2, 4
          %s250 = int_to_ptr.hbm [resolvable:$true] %s249
          %s251 = sshll.u32 [#allocation5], 4
          %s252 = int_to_ptr.vmem [resolvable:$true] %s251
          %257 = dma.hbm_to_vmem [thread:$0]  %s250, 14976, %s252, [#allocation6], 1152, 1152, 72
        $region20: #{channel_attention_spatial_level.2} parent=11 // pred_fallthru
          _
        // Predicated region
        $region21: #{channel_attention_spatial_level.2} parent=11 // pred_check
          %p258 = pneg %p123
        $region22: #{channel_attention_spatial_level.2} parent=11 // pred_check_branch
          %260 = sbr.rel (%p258) target = $region24
        $region23: #{channel_attention_spatial_level.2} parent=11 // pred_region
          _
        $region24: #{channel_attention_spatial_level.2} parent=11 // pred_fallthru
          _
        // Predicated region
        $region25: #{channel_attention_spatial_level.2} parent=11 // pred_check
          %p261 = pneg %p144
        $region26: #{channel_attention_spatial_level.2} parent=11 // pred_check_branch
          %263 = sbr.rel (%p261) target = $region28
        $region27: #{channel_attention_spatial_level.2} parent=11 // pred_region
          _
        $region28: #{channel_attention_spatial_level.2} parent=11 // pred_fallthru
          _
        // Predicated region
        $region29: #{channel_attention_spatial_level.2} parent=11 // pred_check
          %p264 = pneg %p165
        $region30: #{channel_attention_spatial_level.2} parent=11 // pred_check_branch
          %266 = sbr.rel (%p264) target = $region32
        $region31: #{channel_attention_spatial_level.2} parent=11 // pred_region
          _
        $region32: #{channel_attention_spatial_level.2} parent=11 // pred_fallthru
          _
        // Predicated region
        $region33: #{channel_attention_spatial_level.2} parent=11 // pred_check
          %p267 = pneg %p186
        $region34: #{channel_attention_spatial_level.2} parent=11 // pred_check_branch
          %269 = sbr.rel (%p267) target = $region36
        $region35: #{channel_attention_spatial_level.2} parent=11 // pred_region
          _
        $region36: #{channel_attention_spatial_level.2} parent=11 // pred_fallthru
          _
      $region12: #{channel_attention_spatial_level.2} parent=5 // pred_fallthru
        _
      %p270 = scmp.lt.s32.totalorder %s15, 2
      // Predicated region
      $region37: #{channel_attention_spatial_level.2} parent=5 // pred_check
        %p271 = pneg %p270
      $region38: #{channel_attention_spatial_level.2} parent=5 // pred_check_branch
        %273 = sbr.rel (%p271) target = $region40
      $region39: #{channel_attention_spatial_level.2} parent=5 // pred_region
        // Predicated region
        $region41: #{channel_attention_spatial_level.2} parent=39 // pred_check
          %p274 = pneg %p49
        $region42: #{channel_attention_spatial_level.2} parent=39 // pred_check_branch
          %276 = sbr.rel (%p274) target = $region44
        $region43: #{channel_attention_spatial_level.2} parent=39 // pred_region
          %s277 = smul.u32 2, %s23
          %p278 = scmp.lt.s32.totalorder %s22, 1
          %s279 = scalar_select %p278, %s22, 1
          %p280 = scmp.lt.s32.totalorder %s277, 1
          %s281 = scalar_select %p280, %s277, 1
          %s282 = smul.addr %s279, 2
          %s283 = sadd.s32 %s281, %s282
          %s284 = smul.addr %s283, 4
          %s285 = scalar_lea.vmem %s0, %s284
          %s286 = smul.u32 2, %s23
        $region44: #{channel_attention_spatial_level.2} parent=39 // pred_fallthru
          _
      $region40: #{channel_attention_spatial_level.2} parent=5 // pred_fallthru
        _
      %p287 = scmp.le.s32.totalorder 1, %s15
      %p288 = scmp.lt.s32.totalorder %s15, 3
      %p289 = pnand %p287, %p288
      %p290 = pneg %p289
      // Predicated region
      $region45: #{channel_attention_spatial_level.2} parent=5 // pred_check
        _
      $region46: #{channel_attention_spatial_level.2} parent=5 // pred_check_branch
        %292 = sbr.rel (%p289) target = $region48
      $region47: #{channel_attention_spatial_level.2} parent=5 // pred_region
        %s293 = ssub.s32 %s15, 1
        // Predicated region
        $region49: #{channel_attention_spatial_level.2} parent=47 // pred_check
          %p294 = pneg %p81
        $region50: #{channel_attention_spatial_level.2} parent=47 // pred_check_branch
          %296 = sbr.rel (%p294) target = $region52
        $region51: #{channel_attention_spatial_level.2} parent=47 // pred_region
          %298 = dma.done [#allocation4], 4096
        $region52: #{channel_attention_spatial_level.2} parent=47 // pred_fallthru
          _
        // Predicated region
        $region53: #{channel_attention_spatial_level.2} parent=47 // pred_check
          %p299 = pneg %p102
        $region54: #{channel_attention_spatial_level.2} parent=47 // pred_check_branch
          %301 = sbr.rel (%p299) target = $region56
        $region55: #{channel_attention_spatial_level.2} parent=47 // pred_region
          %303 = dma.done [#allocation6], 14976
        $region56: #{channel_attention_spatial_level.2} parent=47 // pred_fallthru
          _
        %s304 = smul.u32 2, %s25
        %p305 = scmp.lt.s32.totalorder %s24, 1
        %s306 = scalar_select %p305, %s24, 1
        %p307 = scmp.lt.s32.totalorder %s304, 1
        %s308 = scalar_select %p307, %s304, 1
        %s309 = smul.addr %s306, 2
        %s310 = sadd.s32 %s308, %s309
        %s311 = smul.addr %s310, 4
        %s312 = scalar_lea.vmem %s0, %s311
        %p313 = pneg %p55
        %p314 = pneg %p52
        %p315 = pneg %p81
        %p316 = pneg %p78
        %p317 = pneg %p102
        %p318 = pneg %p99
        %p319 = pneg %p123
        %p320 = pneg %p120
        %p321 = pneg %p144
        %p322 = pneg %p141
        %p323 = pneg %p165
        %p324 = pneg %p162
        %p325 = pneg %p186
        %p326 = pneg %p183
        %p327 = pneg %p212
        %p328 = pneg %p209
        %p329 = scmp.lt.s32.totalorder %s24, 1
        %s330 = scalar_select %p329, %s24, 1
        %s331 = smul.addr %s330, 4
        %s332 = scalar_lea.vmem %s7, %s331
        %s333 = smul.u32 2, %s25
        %p334 = scmp.lt.s32.totalorder %s24, 1
        %s335 = scalar_select %p334, %s24, 1
        %p336 = scmp.lt.s32.totalorder %s333, 1
        %s337 = scalar_select %p336, %s333, 1
        %s338 = smul.addr %s335, 2
        %s339 = sadd.s32 %s337, %s338
        %s340 = smul.addr %s339, 4
        %s341 = scalar_lea.vmem %s0, %s340
        %s342 = smul.u32 2, %s25
        %s343 = smul.u32 32, %s25
        %p344 = scmp.lt.s32.totalorder %s24, 1
        %s345 = scalar_select %p344, %s24, 1
        %s346 = smul.addr %s345, 4
        %s347 = scalar_lea.vmem %s7, %s346
        %p348 = scmp.eq.s32.totalorder %s25, 0
        // Predicated region
        $region57: #{channel_attention_spatial_level.2} parent=47 // pred_check
          %p349 = pneg %p348
        $region58: #{channel_attention_spatial_level.2} parent=47 // pred_check_branch
          %351 = sbr.rel (%p349) target = $region60
        $region59: #{channel_attention_spatial_level.2} parent=47 // pred_region
          %vm352 = vcmask 814080
          %353 = vst.msk [vmem:[#allocation2] sm:$0xf] %vm352, 0.0
        $region60: #{channel_attention_spatial_level.2} parent=47 // pred_fallthru
          _
        %v354 = vld [vmem:[#allocation2] sm:$0xf]
        %v355 = vld [vmem:[%s341] sm:$0xff]
        %v356 = vld [vmem:[#allocation3] sm:$0xff]
        %v357 = vld [vmem:[#allocation3 + $0x8] sm:$0xff]
        %v358 = vld [vmem:[#allocation3 + $0x10] sm:$0xff]
        %v359 = vld [vmem:[#allocation3 + $0x18] sm:$0xff]
        %v360 = vld [vmem:[#allocation3 + $0x20] sm:$0xff]
        %v361 = vld [vmem:[#allocation3 + $0x28] sm:$0xff]
        %v362 = vld [vmem:[#allocation3 + $0x30] sm:$0xff]
        %v363 = vld [vmem:[#allocation3 + $0x38] sm:$0xff]
        %v364 = vld [vmem:[#allocation3 + $0x40] sm:$0xff]
        %v365 = vld [vmem:[#allocation3 + $0x48] sm:$0xff]
        %v366 = vld [vmem:[#allocation3 + $0x50] sm:$0xff]
        %v367 = vld [vmem:[#allocation3 + $0x58] sm:$0xff]
        %v368 = vld [vmem:[#allocation3 + $0x60] sm:$0xff]
        %v369 = vld [vmem:[#allocation3 + $0x68] sm:$0xff]
        %v370 = vld [vmem:[#allocation3 + $0x70] sm:$0xff]
        %v371 = vld [vmem:[#allocation3 + $0x78] sm:$0xff]
        %v372 = vld [vmem:[#allocation3 + $0x80] sm:$0xff]
        %v373 = vld [vmem:[#allocation3 + $0x88] sm:$0xff]
        %v374 = vld [vmem:[#allocation3 + $0x90] sm:$0xff]
        %v375 = vld [vmem:[#allocation3 + $0x98] sm:$0xff]
        %v376 = vld [vmem:[#allocation3 + $0xa0] sm:$0xff]
        %v377 = vld [vmem:[#allocation3 + $0xa8] sm:$0xff]
        %v378 = vld [vmem:[#allocation3 + $0xb0] sm:$0xff]
        %v379 = vld [vmem:[#allocation3 + $0xb8] sm:$0xff]
        %v380 = vld [vmem:[#allocation3 + $0xc0] sm:$0xff]
        %v381 = vld [vmem:[#allocation3 + $0xc8] sm:$0xff]
        %v382 = vld [vmem:[#allocation3 + $0xd0] sm:$0xff]
        %v383 = vld [vmem:[#allocation3 + $0xd8] sm:$0xff]
        %v384 = vld [vmem:[#allocation3 + $0xe0] sm:$0xff]
        %v385 = vld [vmem:[#allocation3 + $0xe8] sm:$0xff]
        %v386 = vld [vmem:[#allocation3 + $0xf0] sm:$0xff]
        %v387 = vld [vmem:[#allocation3 + $0xf8] sm:$0xff]
        %389 = vst [vmem:[#allocation1] ss:$2 sm:$0xff] %v355
        %v390 = vld.sshfl [vmem:[#allocation1] sm:$0xff pattern:$0x75316420]
        %v391 = vld.sshfl [vmem:[#allocation1 + $0x8] sm:$0xff pattern:$0x75316420]
        %394 = vmatpush.msra.mxu0 %v371
        %395 = vmatpush.msra.mxu0 %v370
        %396 = vmatpush.msra.mxu0 %v369
        %397 = vmatpush.msra.mxu0 %v368
        %398 = vmatpush.msra.mxu0 %v367
        %399 = vmatpush.msra.mxu0 %v366
        %400 = vmatpush.msra.mxu0 %v365
        %401 = vmatpush.msra.mxu0 %v364
        %402 = vmatpush.msra.mxu0 %v363
        %403 = vmatpush.msra.mxu0 %v362
        %404 = vmatpush.msra.mxu0 %v361
        %405 = vmatpush.msra.mxu0 %v360
        %406 = vmatpush.msra.mxu0 %v359
        %407 = vmatpush.msra.mxu0 %v358
        %408 = vmatpush.msra.mxu0 %v357
        %409 = vmatpush.msra.mxu0 %v356
        %410 = vmatmul.f32.gmra.mxu0 %v390
        %v411 = vpop.f32.mrf.mxu0
        %v412 = vadd.f32 0.0, %v411
        %413 = vdwg.mxu0
        %414 = vmatpush.msra.mxu0 %v387
        %415 = vmatpush.msra.mxu0 %v386
        %416 = vmatpush.msra.mxu0 %v385
        %417 = vmatpush.msra.mxu0 %v384
        %418 = vmatpush.msra.mxu0 %v383
        %419 = vmatpush.msra.mxu0 %v382
        %420 = vmatpush.msra.mxu0 %v381
        %421 = vmatpush.msra.mxu0 %v380
        %422 = vmatpush.msra.mxu0 %v379
        %423 = vmatpush.msra.mxu0 %v378
        %424 = vmatpush.msra.mxu0 %v377
        %425 = vmatpush.msra.mxu0 %v376
        %426 = vmatpush.msra.mxu0 %v375
        %427 = vmatpush.msra.mxu0 %v374
        %428 = vmatpush.msra.mxu0 %v373
        %429 = vmatpush.msra.mxu0 %v372
        %430 = vmatmul.f32.gmra.mxu0 %v391
        %v431 = vpop.f32.mrf.mxu0
        %v432 = vadd.f32 %v412, %v431
        %433 = vdwg.mxu0
        %v434 = vadd.f32 %v354, %v432
        %vm435 = vcmask 814080
        %436 = vst.msk [vmem:[#allocation2] sm:$0xf] %vm435, %v434
        // Predicated region
        $region61: #{channel_attention_spatial_level.2} parent=47 // pred_check
          %p437 = pneg %p348
        $region62: #{channel_attention_spatial_level.2} parent=47 // pred_check_branch
          %439 = sbr.rel (%p437) target = $region64
        $region63: #{channel_attention_spatial_level.2} parent=47 // pred_region
          %v440 = vld [vmem:[#allocation5] sm:$0xff]
          %v441 = vld [vmem:[#allocation5 + $0x8] sm:$0xff]
          %v442 = vld [vmem:[#allocation5 + $0x10] sm:$0xff]
          %v443 = vld [vmem:[#allocation5 + $0x18] sm:$0xff]
          %v444 = vld [vmem:[#allocation5 + $0x20] sm:$0xff]
          %v445 = vld [vmem:[#allocation5 + $0x28] sm:$0xff]
          %v446 = vld [vmem:[#allocation5 + $0x30] sm:$0xff]
          %v447 = vld [vmem:[#allocation5 + $0x38] sm:$0xff]
          %v448 = vld [vmem:[#allocation5 + $0x40] sm:$0xff]
          %v449 = vld [vmem:[#allocation5 + $0x48] sm:$0xff]
          %v450 = vld [vmem:[#allocation5 + $0x50] sm:$0xff]
          %v451 = vld [vmem:[#allocation5 + $0x58] sm:$0xff]
          %v452 = vld [vmem:[#allocation5 + $0x60] sm:$0xff]
          %v453 = vld [vmem:[#allocation5 + $0x68] sm:$0xff]
          %v454 = vld [vmem:[#allocation5 + $0x70] sm:$0xff]
          %v455 = vld [vmem:[#allocation5 + $0x78] sm:$0xff]
          %v456 = vld [vmem:[#allocation5 + $0x80] sm:$0xff]
          %v457 = vld [vmem:[#allocation5 + $0x88] sm:$0xff]
          %v458 = vld [vmem:[#allocation5 + $0x90] sm:$0xff]
          %v459 = vld [vmem:[#allocation5 + $0x98] sm:$0xff]
          %v460 = vld [vmem:[#allocation5 + $0xa0] sm:$0xff]
          %v461 = vld [vmem:[#allocation5 + $0xa8] sm:$0xff]
          %v462 = vld [vmem:[#allocation5 + $0xb0] sm:$0xff]
          %v463 = vld [vmem:[#allocation5 + $0xb8] sm:$0xff]
          %v464 = vld [vmem:[#allocation5 + $0xc0] sm:$0xff]
          %v465 = vld [vmem:[#allocation5 + $0xc8] sm:$0xff]
          %v466 = vld [vmem:[#allocation5 + $0xd0] sm:$0xff]
          %v467 = vld [vmem:[#allocation5 + $0xd8] sm:$0xff]
          %v468 = vld [vmem:[#allocation5 + $0xe0] sm:$0xff]
          %v469 = vld [vmem:[#allocation5 + $0xe8] sm:$0xff]
          %v470 = vld [vmem:[#allocation5 + $0xf0] sm:$0xff]
          %v471 = vld [vmem:[#allocation5 + $0xf8] sm:$0xff]
          %v472 = vld [vmem:[#allocation5 + $0x100] sm:$0xff]
          %v473 = vld [vmem:[#allocation5 + $0x108] sm:$0xff]
          %v474 = vld [vmem:[#allocation5 + $0x110] sm:$0xff]
          %v475 = vld [vmem:[#allocation5 + $0x118] sm:$0xff]
          %v476 = vld [vmem:[#allocation5 + $0x120] sm:$0xff]
          %v477 = vld [vmem:[#allocation5 + $0x128] sm:$0xff]
          %v478 = vld [vmem:[#allocation5 + $0x130] sm:$0xff]
          %v479 = vld [vmem:[#allocation5 + $0x138] sm:$0xff]
          %v480 = vld [vmem:[#allocation5 + $0x140] sm:$0xff]
          %v481 = vld [vmem:[#allocation5 + $0x148] sm:$0xff]
          %v482 = vld [vmem:[#allocation5 + $0x150] sm:$0xff]
          %v483 = vld [vmem:[#allocation5 + $0x158] sm:$0xff]
          %v484 = vld [vmem:[#allocation5 + $0x160] sm:$0xff]
          %v485 = vld [vmem:[#allocation5 + $0x168] sm:$0xff]
          %v486 = vld [vmem:[#allocation5 + $0x170] sm:$0xff]
          %v487 = vld [vmem:[#allocation5 + $0x178] sm:$0xff]
          %v488 = vld [vmem:[#allocation5 + $0x180] sm:$0xff]
          %v489 = vld [vmem:[#allocation5 + $0x188] sm:$0xff]
          %v490 = vld [vmem:[#allocation5 + $0x190] sm:$0xff]
          %v491 = vld [vmem:[#allocation5 + $0x198] sm:$0xff]
          %v492 = vld [vmem:[#allocation5 + $0x1a0] sm:$0xff]
          %v493 = vld [vmem:[#allocation5 + $0x1a8] sm:$0xff]
          %v494 = vld [vmem:[#allocation5 + $0x1b0] sm:$0xff]
          %v495 = vld [vmem:[#allocation5 + $0x1b8] sm:$0xff]
          %v496 = vld [vmem:[#allocation5 + $0x1c0] sm:$0xff]
          %v497 = vld [vmem:[#allocation5 + $0x1c8] sm:$0xff]
          %v498 = vld [vmem:[#allocation5 + $0x1d0] sm:$0xff]
          %v499 = vld [vmem:[#allocation5 + $0x1d8] sm:$0xff]
          %v500 = vld [vmem:[#allocation5 + $0x1e0] sm:$0xff]
          %v501 = vld [vmem:[#allocation5 + $0x1e8] sm:$0xff]
          %v502 = vld [vmem:[#allocation5 + $0x1f0] sm:$0xff]
          %v503 = vld [vmem:[#allocation5 + $0x1f8] sm:$0xff]
          %v504 = vld [vmem:[#allocation5 + $0x200] sm:$0xff]
          %v505 = vld [vmem:[#allocation5 + $0x208] sm:$0xff]
          %v506 = vld [vmem:[#allocation5 + $0x210] sm:$0xff]
          %v507 = vld [vmem:[#allocation5 + $0x218] sm:$0xff]
          %v508 = vld [vmem:[#allocation5 + $0x220] sm:$0xff]
          %v509 = vld [vmem:[#allocation5 + $0x228] sm:$0xff]
          %v510 = vld [vmem:[#allocation5 + $0x230] sm:$0xff]
          %v511 = vld [vmem:[#allocation5 + $0x238] sm:$0xff]
          %v512 = vld [vmem:[#allocation5 + $0x240] sm:$0xff]
          %v513 = vld [vmem:[#allocation5 + $0x248] sm:$0xff]
          %v514 = vld [vmem:[#allocation5 + $0x250] sm:$0xff]
          %v515 = vld [vmem:[#allocation5 + $0x258] sm:$0xff]
          %v516 = vld [vmem:[#allocation5 + $0x260] sm:$0xff]
          %v517 = vld [vmem:[#allocation5 + $0x268] sm:$0xff]
          %v518 = vld [vmem:[#allocation5 + $0x270] sm:$0xff]
          %v519 = vld [vmem:[#allocation5 + $0x278] sm:$0xff]
          %v520 = vld [vmem:[#allocation5 + $0x280] sm:$0xff]
          %v521 = vld [vmem:[#allocation5 + $0x288] sm:$0xff]
          %v522 = vld [vmem:[#allocation5 + $0x290] sm:$0xff]
          %v523 = vld [vmem:[#allocation5 + $0x298] sm:$0xff]
          %v524 = vld [vmem:[#allocation5 + $0x2a0] sm:$0xff]
          %v525 = vld [vmem:[#allocation5 + $0x2a8] sm:$0xff]
          %v526 = vld [vmem:[#allocation5 + $0x2b0] sm:$0xff]
          %v527 = vld [vmem:[#allocation5 + $0x2b8] sm:$0xff]
          %v528 = vld [vmem:[#allocation5 + $0x2c0] sm:$0xff]
          %v529 = vld [vmem:[#allocation5 + $0x2c8] sm:$0xff]
          %v530 = vld [vmem:[#allocation5 + $0x2d0] sm:$0xff]
          %v531 = vld [vmem:[#allocation5 + $0x2d8] sm:$0xff]
          %v532 = vld [vmem:[#allocation5 + $0x2e0] sm:$0xff]
          %v533 = vld [vmem:[#allocation5 + $0x2e8] sm:$0xff]
          %v534 = vld [vmem:[#allocation5 + $0x2f0] sm:$0xff]
          %v535 = vld [vmem:[#allocation5 + $0x2f8] sm:$0xff]
          %v536 = vld [vmem:[#allocation5 + $0x300] sm:$0xff]
          %v537 = vld [vmem:[#allocation5 + $0x308] sm:$0xff]
          %v538 = vld [vmem:[#allocation5 + $0x310] sm:$0xff]
          %v539 = vld [vmem:[#allocation5 + $0x318] sm:$0xff]
          %v540 = vld [vmem:[#allocation5 + $0x320] sm:$0xff]
          %v541 = vld [vmem:[#allocation5 + $0x328] sm:$0xff]
          %v542 = vld [vmem:[#allocation5 + $0x330] sm:$0xff]
          %v543 = vld [vmem:[#allocation5 + $0x338] sm:$0xff]
          %v544 = vld [vmem:[#allocation5 + $0x340] sm:$0xff]
          %v545 = vld [vmem:[#allocation5 + $0x348] sm:$0xff]
          %v546 = vld [vmem:[#allocation5 + $0x350] sm:$0xff]
          %v547 = vld [vmem:[#allocation5 + $0x358] sm:$0xff]
          %v548 = vld [vmem:[#allocation5 + $0x360] sm:$0xf]
          %v549 = vld [vmem:[#allocation5 + $0x368] sm:$0xf]
          %v550 = vld [vmem:[#allocation5 + $0x370] sm:$0xf]
          %v551 = vld [vmem:[#allocation5 + $0x378] sm:$0xf]
          %v552 = vld [vmem:[#allocation5 + $0x380] sm:$0xf]
          %v553 = vld [vmem:[#allocation5 + $0x388] sm:$0xf]
          %v554 = vld [vmem:[#allocation5 + $0x390] sm:$0xf]
          %v555 = vld [vmem:[#allocation5 + $0x398] sm:$0xf]
          %v556 = vld [vmem:[#allocation5 + $0x3a0] sm:$0xf]
          %v557 = vld [vmem:[#allocation2] sm:$0xf]
          %v558 = vld [vmem:[%s4] sm:$0x3]
          %vm559 = vcmask 818176
          %v561 = vsel %vm559, %v557, 0
          %vm563 = vcmask 1043456
          %v565 = vsel %vm563, %v548, 0
          %v568 = vsel %vm563, %v549, 0
          %v571 = vsel %vm563, %v550, 0
          %v574 = vsel %vm563, %v551, 0
          %v577 = vsel %vm563, %v552, 0
          %v580 = vsel %vm563, %v553, 0
          %v583 = vsel %vm563, %v554, 0
          %v586 = vsel %vm563, %v555, 0
          %v589 = vsel %vm563, %v556, 0
          %591 = vmatpush.msra.mxu0 0.0
          %592 = vmatpush.msra.mxu0 0.0
          %593 = vmatpush.msra.mxu0 0.0
          %594 = vmatpush.msra.mxu0 %v565
          %595 = vmatpush.msra.mxu0 %v539
          %596 = vmatpush.msra.mxu0 %v530
          %597 = vmatpush.msra.mxu0 %v521
          %598 = vmatpush.msra.mxu0 %v512
          %599 = vmatpush.msra.mxu0 %v503
          %600 = vmatpush.msra.mxu0 %v494
          %601 = vmatpush.msra.mxu0 %v485
          %602 = vmatpush.msra.mxu0 %v476
          %603 = vmatpush.msra.mxu0 %v467
          %604 = vmatpush.msra.mxu0 %v458
          %605 = vmatpush.msra.mxu0 %v449
          %606 = vmatpush.msra.mxu0 %v440
          %607 = vmatmul.f32.gmra.mxu0 %v561
          %v608 = vpop.f32.mrf.mxu0
          %v609 = vadd.f32 0.0, %v608
          %610 = vdwg.mxu0
          %611 = vmatpush.msra.mxu0 0.0
          %612 = vmatpush.msra.mxu0 0.0
          %613 = vmatpush.msra.mxu0 0.0
          %614 = vmatpush.msra.mxu0 %v568
          %615 = vmatpush.msra.mxu0 %v540
          %616 = vmatpush.msra.mxu0 %v531
          %617 = vmatpush.msra.mxu0 %v522
          %618 = vmatpush.msra.mxu0 %v513
          %619 = vmatpush.msra.mxu0 %v504
          %620 = vmatpush.msra.mxu0 %v495
          %621 = vmatpush.msra.mxu0 %v486
          %622 = vmatpush.msra.mxu0 %v477
          %623 = vmatpush.msra.mxu0 %v468
          %624 = vmatpush.msra.mxu0 %v459
          %625 = vmatpush.msra.mxu0 %v450
          %626 = vmatpush.msra.mxu0 %v441
          %627 = vmatmul.f32.gmra.mxu0 %v561
          %v628 = vpop.f32.mrf.mxu0
          %v629 = vadd.f32 0.0, %v628
          %630 = vdwg.mxu0
          %631 = vmatpush.msra.mxu0 0.0
          %632 = vmatpush.msra.mxu0 0.0
          %633 = vmatpush.msra.mxu0 0.0
          %634 = vmatpush.msra.mxu0 %v571
          %635 = vmatpush.msra.mxu0 %v541
          %636 = vmatpush.msra.mxu0 %v532
          %637 = vmatpush.msra.mxu0 %v523
          %638 = vmatpush.msra.mxu0 %v514
          %639 = vmatpush.msra.mxu0 %v505
          %640 = vmatpush.msra.mxu0 %v496
          %641 = vmatpush.msra.mxu0 %v487
          %642 = vmatpush.msra.mxu0 %v478
          %643 = vmatpush.msra.mxu0 %v469
          %644 = vmatpush.msra.mxu0 %v460
          %645 = vmatpush.msra.mxu0 %v451
          %646 = vmatpush.msra.mxu0 %v442
          %647 = vmatmul.f32.gmra.mxu0 %v561
          %v648 = vpop.f32.mrf.mxu0
          %v649 = vadd.f32 0.0, %v648
          %650 = vdwg.mxu0
          %651 = vmatpush.msra.mxu0 0.0
          %652 = vmatpush.msra.mxu0 0.0
          %653 = vmatpush.msra.mxu0 0.0
          %654 = vmatpush.msra.mxu0 %v574
          %655 = vmatpush.msra.mxu0 %v542
          %656 = vmatpush.msra.mxu0 %v533
          %657 = vmatpush.msra.mxu0 %v524
          %658 = vmatpush.msra.mxu0 %v515
          %659 = vmatpush.msra.mxu0 %v506
          %660 = vmatpush.msra.mxu0 %v497
          %661 = vmatpush.msra.mxu0 %v488
          %662 = vmatpush.msra.mxu0 %v479
          %663 = vmatpush.msra.mxu0 %v470
          %664 = vmatpush.msra.mxu0 %v461
          %665 = vmatpush.msra.mxu0 %v452
          %666 = vmatpush.msra.mxu0 %v443
          %667 = vmatmul.f32.gmra.mxu0 %v561
          %v668 = vpop.f32.mrf.mxu0
          %v669 = vadd.f32 0.0, %v668
          %670 = vdwg.mxu0
          %671 = vmatpush.msra.mxu0 0.0
          %672 = vmatpush.msra.mxu0 0.0
          %673 = vmatpush.msra.mxu0 0.0
          %674 = vmatpush.msra.mxu0 %v577
          %675 = vmatpush.msra.mxu0 %v543
          %676 = vmatpush.msra.mxu0 %v534
          %677 = vmatpush.msra.mxu0 %v525
          %678 = vmatpush.msra.mxu0 %v516
          %679 = vmatpush.msra.mxu0 %v507
          %680 = vmatpush.msra.mxu0 %v498
          %681 = vmatpush.msra.mxu0 %v489
          %682 = vmatpush.msra.mxu0 %v480
          %683 = vmatpush.msra.mxu0 %v471
          %684 = vmatpush.msra.mxu0 %v462
          %685 = vmatpush.msra.mxu0 %v453
          %686 = vmatpush.msra.mxu0 %v444
          %687 = vmatmul.f32.gmra.mxu0 %v561
          %v688 = vpop.f32.mrf.mxu0
          %v689 = vadd.f32 0.0, %v688
          %690 = vdwg.mxu0
          %691 = vmatpush.msra.mxu0 0.0
          %692 = vmatpush.msra.mxu0 0.0
          %693 = vmatpush.msra.mxu0 0.0
          %694 = vmatpush.msra.mxu0 %v580
          %695 = vmatpush.msra.mxu0 %v544
          %696 = vmatpush.msra.mxu0 %v535
          %697 = vmatpush.msra.mxu0 %v526
          %698 = vmatpush.msra.mxu0 %v517
          %699 = vmatpush.msra.mxu0 %v508
          %700 = vmatpush.msra.mxu0 %v499
          %701 = vmatpush.msra.mxu0 %v490
          %702 = vmatpush.msra.mxu0 %v481
          %703 = vmatpush.msra.mxu0 %v472
          %704 = vmatpush.msra.mxu0 %v463
          %705 = vmatpush.msra.mxu0 %v454
          %706 = vmatpush.msra.mxu0 %v445
          %707 = vmatmul.f32.gmra.mxu0 %v561
          %v708 = vpop.f32.mrf.mxu0
          %v709 = vadd.f32 0.0, %v708
          %710 = vdwg.mxu0
          %711 = vmatpush.msra.mxu0 0.0
          %712 = vmatpush.msra.mxu0 0.0
          %713 = vmatpush.msra.mxu0 0.0
          %714 = vmatpush.msra.mxu0 %v583
          %715 = vmatpush.msra.mxu0 %v545
          %716 = vmatpush.msra.mxu0 %v536
          %717 = vmatpush.msra.mxu0 %v527
          %718 = vmatpush.msra.mxu0 %v518
          %719 = vmatpush.msra.mxu0 %v509
          %720 = vmatpush.msra.mxu0 %v500
          %721 = vmatpush.msra.mxu0 %v491
          %722 = vmatpush.msra.mxu0 %v482
          %723 = vmatpush.msra.mxu0 %v473
          %724 = vmatpush.msra.mxu0 %v464
          %725 = vmatpush.msra.mxu0 %v455
          %726 = vmatpush.msra.mxu0 %v446
          %727 = vmatmul.f32.gmra.mxu0 %v561
          %v728 = vpop.f32.mrf.mxu0
          %v729 = vadd.f32 0.0, %v728
          %730 = vdwg.mxu0
          %731 = vmatpush.msra.mxu0 0.0
          %732 = vmatpush.msra.mxu0 0.0
          %733 = vmatpush.msra.mxu0 0.0
          %734 = vmatpush.msra.mxu0 %v586
          %735 = vmatpush.msra.mxu0 %v546
          %736 = vmatpush.msra.mxu0 %v537
          %737 = vmatpush.msra.mxu0 %v528
          %738 = vmatpush.msra.mxu0 %v519
          %739 = vmatpush.msra.mxu0 %v510
          %740 = vmatpush.msra.mxu0 %v501
          %741 = vmatpush.msra.mxu0 %v492
          %742 = vmatpush.msra.mxu0 %v483
          %743 = vmatpush.msra.mxu0 %v474
          %744 = vmatpush.msra.mxu0 %v465
          %745 = vmatpush.msra.mxu0 %v456
          %746 = vmatpush.msra.mxu0 %v447
          %747 = vmatmul.f32.gmra.mxu0 %v561
          %v748 = vpop.f32.mrf.mxu0
          %v749 = vadd.f32 0.0, %v748
          %750 = vdwg.mxu0
          %751 = vmatpush.msra.mxu0 0.0
          %752 = vmatpush.msra.mxu0 0.0
          %753 = vmatpush.msra.mxu0 0.0
          %754 = vmatpush.msra.mxu0 %v589
          %755 = vmatpush.msra.mxu0 %v547
          %756 = vmatpush.msra.mxu0 %v538
          %757 = vmatpush.msra.mxu0 %v529
          %758 = vmatpush.msra.mxu0 %v520
          %759 = vmatpush.msra.mxu0 %v511
          %760 = vmatpush.msra.mxu0 %v502
          %761 = vmatpush.msra.mxu0 %v493
          %762 = vmatpush.msra.mxu0 %v484
          %763 = vmatpush.msra.mxu0 %v475
          %764 = vmatpush.msra.mxu0 %v466
          %765 = vmatpush.msra.mxu0 %v457
          %766 = vmatpush.msra.mxu0 %v448
          %767 = vmatmul.f32.gmra.mxu0 %v561
          %v768 = vpop.f32.mrf.mxu0
          %v769 = vadd.f32 0.0, %v768
          %770 = vdwg.mxu0
          %v771 = vld [vmem:[%s3] sm:$0x3]
          %s772 = scalar_lea.vmem %s3, 2
          %v773 = vld [vmem:[%s772] sm:$0x3]
          %vm774 = vcmask 31744
          %v776 = vsel %vm774, %v773, 0
          %v779 = vsel %vm563, %v629, 0
          %781 = vmatpush.msra.mxu0 0.0
          %782 = vmatpush.msra.mxu0 0.0
          %783 = vmatpush.msra.mxu0 0.0
          %784 = vmatpush.msra.mxu0 0.0
          %785 = vmatpush.msra.mxu0 0.0
          %786 = vmatpush.msra.mxu0 0.0
          %787 = vmatpush.msra.mxu0 0.0
          %788 = vmatpush.msra.mxu0 0.0
          %789 = vmatpush.msra.mxu0 0.0
          %790 = vmatpush.msra.mxu0 0.0
          %791 = vmatpush.msra.mxu0 0.0
          %792 = vmatpush.msra.mxu0 0.0
          %793 = vmatpush.msra.mxu0 0.0
          %794 = vmatpush.msra.mxu0 0.0
          %795 = vmatpush.msra.mxu0 0.0
          %796 = vmatpush.msra.mxu0 %v779
          %797 = vmatmul.f32.gmra.mxu0 %v776
          %v798 = vpop.f32.mrf.mxu0
          %v799 = vadd.f32 0.0, %v798
          %800 = vdwg.mxu0
          %v802 = vsel %vm774, %v771, 0
          %v805 = vsel %vm563, %v609, 0
          %807 = vmatpush.msra.mxu0 0.0
          %808 = vmatpush.msra.mxu0 0.0
          %809 = vmatpush.msra.mxu0 0.0
          %810 = vmatpush.msra.mxu0 0.0
          %811 = vmatpush.msra.mxu0 0.0
          %812 = vmatpush.msra.mxu0 0.0
          %813 = vmatpush.msra.mxu0 0.0
          %814 = vmatpush.msra.mxu0 0.0
          %815 = vmatpush.msra.mxu0 0.0
          %816 = vmatpush.msra.mxu0 0.0
          %817 = vmatpush.msra.mxu0 0.0
          %818 = vmatpush.msra.mxu0 0.0
          %819 = vmatpush.msra.mxu0 0.0
          %820 = vmatpush.msra.mxu0 0.0
          %821 = vmatpush.msra.mxu0 0.0
          %822 = vmatpush.msra.mxu0 %v805
          %823 = vmatmul.f32.gmra.mxu0 %v802
          %v824 = vpop.f32.mrf.mxu0
          %v825 = vadd.f32 %v799, %v824
          %826 = vdwg.mxu0
          %s827 = scalar_lea.vmem %s3, 4
          %v828 = vld [vmem:[%s827] sm:$0x3]
          %v830 = vsel %vm774, %v828, 0
          %v833 = vsel %vm563, %v649, 0
          %835 = vmatpush.msra.mxu0 0.0
          %836 = vmatpush.msra.mxu0 0.0
          %837 = vmatpush.msra.mxu0 0.0
          %838 = vmatpush.msra.mxu0 0.0
          %839 = vmatpush.msra.mxu0 0.0
          %840 = vmatpush.msra.mxu0 0.0
          %841 = vmatpush.msra.mxu0 0.0
          %842 = vmatpush.msra.mxu0 0.0
          %843 = vmatpush.msra.mxu0 0.0
          %844 = vmatpush.msra.mxu0 0.0
          %845 = vmatpush.msra.mxu0 0.0
          %846 = vmatpush.msra.mxu0 0.0
          %847 = vmatpush.msra.mxu0 0.0
          %848 = vmatpush.msra.mxu0 0.0
          %849 = vmatpush.msra.mxu0 0.0
          %850 = vmatpush.msra.mxu0 %v833
          %851 = vmatmul.f32.gmra.mxu0 %v830
          %v852 = vpop.f32.mrf.mxu0
          %v853 = vadd.f32 0.0, %v852
          %854 = vdwg.mxu0
          %v855 = vadd.f32 %v825, %v853
          %s856 = scalar_lea.vmem %s3, 6
          %v857 = vld [vmem:[%s856] sm:$0x3]
          %v859 = vsel %vm774, %v857, 0
          %v862 = vsel %vm563, %v669, 0
          %864 = vmatpush.msra.mxu0 0.0
          %865 = vmatpush.msra.mxu0 0.0
          %866 = vmatpush.msra.mxu0 0.0
          %867 = vmatpush.msra.mxu0 0.0
          %868 = vmatpush.msra.mxu0 0.0
          %869 = vmatpush.msra.mxu0 0.0
          %870 = vmatpush.msra.mxu0 0.0
          %871 = vmatpush.msra.mxu0 0.0
          %872 = vmatpush.msra.mxu0 0.0
          %873 = vmatpush.msra.mxu0 0.0
          %874 = vmatpush.msra.mxu0 0.0
          %875 = vmatpush.msra.mxu0 0.0
          %876 = vmatpush.msra.mxu0 0.0
          %877 = vmatpush.msra.mxu0 0.0
          %878 = vmatpush.msra.mxu0 0.0
          %879 = vmatpush.msra.mxu0 %v862
          %880 = vmatmul.f32.gmra.mxu0 %v859
          %v881 = vpop.f32.mrf.mxu0
          %v882 = vadd.f32 0.0, %v881
          %883 = vdwg.mxu0
          %v884 = vadd.f32 %v855, %v882
          %s885 = scalar_lea.vmem %s3, 8
          %v886 = vld [vmem:[%s885] sm:$0x3]
          %v888 = vsel %vm774, %v886, 0
          %v891 = vsel %vm563, %v689, 0
          %893 = vmatpush.msra.mxu0 0.0
          %894 = vmatpush.msra.mxu0 0.0
          %895 = vmatpush.msra.mxu0 0.0
          %896 = vmatpush.msra.mxu0 0.0
          %897 = vmatpush.msra.mxu0 0.0
          %898 = vmatpush.msra.mxu0 0.0
          %899 = vmatpush.msra.mxu0 0.0
          %900 = vmatpush.msra.mxu0 0.0
          %901 = vmatpush.msra.mxu0 0.0
          %902 = vmatpush.msra.mxu0 0.0
          %903 = vmatpush.msra.mxu0 0.0
          %904 = vmatpush.msra.mxu0 0.0
          %905 = vmatpush.msra.mxu0 0.0
          %906 = vmatpush.msra.mxu0 0.0
          %907 = vmatpush.msra.mxu0 0.0
          %908 = vmatpush.msra.mxu0 %v891
          %909 = vmatmul.f32.gmra.mxu0 %v888
          %v910 = vpop.f32.mrf.mxu0
          %v911 = vadd.f32 0.0, %v910
          %912 = vdwg.mxu0
          %v913 = vadd.f32 %v884, %v911
          %s914 = scalar_lea.vmem %s3, 10
          %v915 = vld [vmem:[%s914] sm:$0x3]
          %v917 = vsel %vm774, %v915, 0
          %v920 = vsel %vm563, %v709, 0
          %922 = vmatpush.msra.mxu0 0.0
          %923 = vmatpush.msra.mxu0 0.0
          %924 = vmatpush.msra.mxu0 0.0
          %925 = vmatpush.msra.mxu0 0.0
          %926 = vmatpush.msra.mxu0 0.0
          %927 = vmatpush.msra.mxu0 0.0
          %928 = vmatpush.msra.mxu0 0.0
          %929 = vmatpush.msra.mxu0 0.0
          %930 = vmatpush.msra.mxu0 0.0
          %931 = vmatpush.msra.mxu0 0.0
          %932 = vmatpush.msra.mxu0 0.0
          %933 = vmatpush.msra.mxu0 0.0
          %934 = vmatpush.msra.mxu0 0.0
          %935 = vmatpush.msra.mxu0 0.0
          %936 = vmatpush.msra.mxu0 0.0
          %937 = vmatpush.msra.mxu0 %v920
          %938 = vmatmul.f32.gmra.mxu0 %v917
          %v939 = vpop.f32.mrf.mxu0
          %v940 = vadd.f32 0.0, %v939
          %941 = vdwg.mxu0
          %v942 = vadd.f32 %v913, %v940
          %s943 = scalar_lea.vmem %s3, 12
          %v944 = vld [vmem:[%s943] sm:$0x3]
          %v946 = vsel %vm774, %v944, 0
          %v949 = vsel %vm563, %v729, 0
          %951 = vmatpush.msra.mxu0 0.0
          %952 = vmatpush.msra.mxu0 0.0
          %953 = vmatpush.msra.mxu0 0.0
          %954 = vmatpush.msra.mxu0 0.0
          %955 = vmatpush.msra.mxu0 0.0
          %956 = vmatpush.msra.mxu0 0.0
          %957 = vmatpush.msra.mxu0 0.0
          %958 = vmatpush.msra.mxu0 0.0
          %959 = vmatpush.msra.mxu0 0.0
          %960 = vmatpush.msra.mxu0 0.0
          %961 = vmatpush.msra.mxu0 0.0
          %962 = vmatpush.msra.mxu0 0.0
          %963 = vmatpush.msra.mxu0 0.0
          %964 = vmatpush.msra.mxu0 0.0
          %965 = vmatpush.msra.mxu0 0.0
          %966 = vmatpush.msra.mxu0 %v949
          %967 = vmatmul.f32.gmra.mxu0 %v946
          %v968 = vpop.f32.mrf.mxu0
          %v969 = vadd.f32 0.0, %v968
          %970 = vdwg.mxu0
          %v971 = vadd.f32 %v942, %v969
          %s972 = scalar_lea.vmem %s3, 14
          %v973 = vld [vmem:[%s972] sm:$0x3]
          %v975 = vsel %vm774, %v973, 0
          %v978 = vsel %vm563, %v749, 0
          %980 = vmatpush.msra.mxu0 0.0
          %981 = vmatpush.msra.mxu0 0.0
          %982 = vmatpush.msra.mxu0 0.0
          %983 = vmatpush.msra.mxu0 0.0
          %984 = vmatpush.msra.mxu0 0.0
          %985 = vmatpush.msra.mxu0 0.0
          %986 = vmatpush.msra.mxu0 0.0
          %987 = vmatpush.msra.mxu0 0.0
          %988 = vmatpush.msra.mxu0 0.0
          %989 = vmatpush.msra.mxu0 0.0
          %990 = vmatpush.msra.mxu0 0.0
          %991 = vmatpush.msra.mxu0 0.0
          %992 = vmatpush.msra.mxu0 0.0
          %993 = vmatpush.msra.mxu0 0.0
          %994 = vmatpush.msra.mxu0 0.0
          %995 = vmatpush.msra.mxu0 %v978
          %996 = vmatmul.f32.gmra.mxu0 %v975
          %v997 = vpop.f32.mrf.mxu0
          %v998 = vadd.f32 0.0, %v997
          %999 = vdwg.mxu0
          %v1000 = vadd.f32 %v971, %v998
          %s1001 = scalar_lea.vmem %s3, 16
          %v1002 = vld [vmem:[%s1001] sm:$0x3]
          %v1004 = vsel %vm774, %v1002, 0
          %v1007 = vsel %vm563, %v769, 0
          %1009 = vmatpush.msra.mxu0 0.0
          %1010 = vmatpush.msra.mxu0 0.0
          %1011 = vmatpush.msra.mxu0 0.0
          %1012 = vmatpush.msra.mxu0 0.0
          %1013 = vmatpush.msra.mxu0 0.0
          %1014 = vmatpush.msra.mxu0 0.0
          %1015 = vmatpush.msra.mxu0 0.0
          %1016 = vmatpush.msra.mxu0 0.0
          %1017 = vmatpush.msra.mxu0 0.0
          %1018 = vmatpush.msra.mxu0 0.0
          %1019 = vmatpush.msra.mxu0 0.0
          %1020 = vmatpush.msra.mxu0 0.0
          %1021 = vmatpush.msra.mxu0 0.0
          %1022 = vmatpush.msra.mxu0 0.0
          %1023 = vmatpush.msra.mxu0 0.0
          %1024 = vmatpush.msra.mxu0 %v1007
          %1025 = vmatmul.f32.gmra.mxu0 %v1004
          %v1026 = vpop.f32.mrf.mxu0
          %v1027 = vadd.f32 0.0, %v1026
          %1028 = vdwg.mxu0
          %v1029 = vadd.f32 %v1000, %v1027
          %1031 = vset.pattern.permute.xlu0 0
          %1032 = vperm.xlu0 %1031, %v558
          %v1033 = vpop.permute.xlu0 %1032
          %v1035 = vadd.f32 %v1029, %v1033
          %v1036 = vmax.f32 %v1035, 0.0
          %v1037 = vld [vmem:[%s6] sm:$0xf]
          %v1039 = vsel %vm559, %v1036, 0
          %1041 = vmatpush.msra.mxu0 0.0
          %1042 = vmatpush.msra.mxu0 0.0
          %1043 = vmatpush.msra.mxu0 0.0
          %1044 = vmatpush.msra.mxu0 %v565
          %1045 = vmatpush.msra.mxu0 %v539
          %1046 = vmatpush.msra.mxu0 %v530
          %1047 = vmatpush.msra.mxu0 %v521
          %1048 = vmatpush.msra.mxu0 %v512
          %1049 = vmatpush.msra.mxu0 %v503
          %1050 = vmatpush.msra.mxu0 %v494
          %1051 = vmatpush.msra.mxu0 %v485
          %1052 = vmatpush.msra.mxu0 %v476
          %1053 = vmatpush.msra.mxu0 %v467
          %1054 = vmatpush.msra.mxu0 %v458
          %1055 = vmatpush.msra.mxu0 %v449
          %1056 = vmatpush.msra.mxu0 %v440
          %1057 = vmatmul.f32.gmra.mxu0 %v1039
          %v1058 = vpop.f32.mrf.mxu0
          %v1059 = vadd.f32 0.0, %v1058
          %1060 = vdwg.mxu0
          %1061 = vmatpush.msra.mxu0 0.0
          %1062 = vmatpush.msra.mxu0 0.0
          %1063 = vmatpush.msra.mxu0 0.0
          %1064 = vmatpush.msra.mxu0 %v568
          %1065 = vmatpush.msra.mxu0 %v540
          %1066 = vmatpush.msra.mxu0 %v531
          %1067 = vmatpush.msra.mxu0 %v522
          %1068 = vmatpush.msra.mxu0 %v513
          %1069 = vmatpush.msra.mxu0 %v504
          %1070 = vmatpush.msra.mxu0 %v495
          %1071 = vmatpush.msra.mxu0 %v486
          %1072 = vmatpush.msra.mxu0 %v477
          %1073 = vmatpush.msra.mxu0 %v468
          %1074 = vmatpush.msra.mxu0 %v459
          %1075 = vmatpush.msra.mxu0 %v450
          %1076 = vmatpush.msra.mxu0 %v441
          %1077 = vmatmul.f32.gmra.mxu0 %v1039
          %v1078 = vpop.f32.mrf.mxu0
          %v1079 = vadd.f32 0.0, %v1078
          %1080 = vdwg.mxu0
          %1081 = vmatpush.msra.mxu0 0.0
          %1082 = vmatpush.msra.mxu0 0.0
          %1083 = vmatpush.msra.mxu0 0.0
          %1084 = vmatpush.msra.mxu0 %v571
          %1085 = vmatpush.msra.mxu0 %v541
          %1086 = vmatpush.msra.mxu0 %v532
          %1087 = vmatpush.msra.mxu0 %v523
          %1088 = vmatpush.msra.mxu0 %v514
          %1089 = vmatpush.msra.mxu0 %v505
          %1090 = vmatpush.msra.mxu0 %v496
          %1091 = vmatpush.msra.mxu0 %v487
          %1092 = vmatpush.msra.mxu0 %v478
          %1093 = vmatpush.msra.mxu0 %v469
          %1094 = vmatpush.msra.mxu0 %v460
          %1095 = vmatpush.msra.mxu0 %v451
          %1096 = vmatpush.msra.mxu0 %v442
          %1097 = vmatmul.f32.gmra.mxu0 %v1039
          %v1098 = vpop.f32.mrf.mxu0
          %v1099 = vadd.f32 0.0, %v1098
          %1100 = vdwg.mxu0
          %1101 = vmatpush.msra.mxu0 0.0
          %1102 = vmatpush.msra.mxu0 0.0
          %1103 = vmatpush.msra.mxu0 0.0
          %1104 = vmatpush.msra.mxu0 %v574
          %1105 = vmatpush.msra.mxu0 %v542
          %1106 = vmatpush.msra.mxu0 %v533
          %1107 = vmatpush.msra.mxu0 %v524
          %1108 = vmatpush.msra.mxu0 %v515
          %1109 = vmatpush.msra.mxu0 %v506
          %1110 = vmatpush.msra.mxu0 %v497
          %1111 = vmatpush.msra.mxu0 %v488
          %1112 = vmatpush.msra.mxu0 %v479
          %1113 = vmatpush.msra.mxu0 %v470
          %1114 = vmatpush.msra.mxu0 %v461
          %1115 = vmatpush.msra.mxu0 %v452
          %1116 = vmatpush.msra.mxu0 %v443
          %1117 = vmatmul.f32.gmra.mxu0 %v1039
          %v1118 = vpop.f32.mrf.mxu0
          %v1119 = vadd.f32 0.0, %v1118
          %1120 = vdwg.mxu0
          %1121 = vmatpush.msra.mxu0 0.0
          %1122 = vmatpush.msra.mxu0 0.0
          %1123 = vmatpush.msra.mxu0 0.0
          %1124 = vmatpush.msra.mxu0 %v577
          %1125 = vmatpush.msra.mxu0 %v543
          %1126 = vmatpush.msra.mxu0 %v534
          %1127 = vmatpush.msra.mxu0 %v525
          %1128 = vmatpush.msra.mxu0 %v516
          %1129 = vmatpush.msra.mxu0 %v507
          %1130 = vmatpush.msra.mxu0 %v498
          %1131 = vmatpush.msra.mxu0 %v489
          %1132 = vmatpush.msra.mxu0 %v480
          %1133 = vmatpush.msra.mxu0 %v471
          %1134 = vmatpush.msra.mxu0 %v462
          %1135 = vmatpush.msra.mxu0 %v453
          %1136 = vmatpush.msra.mxu0 %v444
          %1137 = vmatmul.f32.gmra.mxu0 %v1039
          %v1138 = vpop.f32.mrf.mxu0
          %v1139 = vadd.f32 0.0, %v1138
          %1140 = vdwg.mxu0
          %1141 = vmatpush.msra.mxu0 0.0
          %1142 = vmatpush.msra.mxu0 0.0
          %1143 = vmatpush.msra.mxu0 0.0
          %1144 = vmatpush.msra.mxu0 %v580
          %1145 = vmatpush.msra.mxu0 %v544
          %1146 = vmatpush.msra.mxu0 %v535
          %1147 = vmatpush.msra.mxu0 %v526
          %1148 = vmatpush.msra.mxu0 %v517
          %1149 = vmatpush.msra.mxu0 %v508
          %1150 = vmatpush.msra.mxu0 %v499
          %1151 = vmatpush.msra.mxu0 %v490
          %1152 = vmatpush.msra.mxu0 %v481
          %1153 = vmatpush.msra.mxu0 %v472
          %1154 = vmatpush.msra.mxu0 %v463
          %1155 = vmatpush.msra.mxu0 %v454
          %1156 = vmatpush.msra.mxu0 %v445
          %1157 = vmatmul.f32.gmra.mxu0 %v1039
          %v1158 = vpop.f32.mrf.mxu0
          %v1159 = vadd.f32 0.0, %v1158
          %1160 = vdwg.mxu0
          %1161 = vmatpush.msra.mxu0 0.0
          %1162 = vmatpush.msra.mxu0 0.0
          %1163 = vmatpush.msra.mxu0 0.0
          %1164 = vmatpush.msra.mxu0 %v583
          %1165 = vmatpush.msra.mxu0 %v545
          %1166 = vmatpush.msra.mxu0 %v536
          %1167 = vmatpush.msra.mxu0 %v527
          %1168 = vmatpush.msra.mxu0 %v518
          %1169 = vmatpush.msra.mxu0 %v509
          %1170 = vmatpush.msra.mxu0 %v500
          %1171 = vmatpush.msra.mxu0 %v491
          %1172 = vmatpush.msra.mxu0 %v482
          %1173 = vmatpush.msra.mxu0 %v473
          %1174 = vmatpush.msra.mxu0 %v464
          %1175 = vmatpush.msra.mxu0 %v455
          %1176 = vmatpush.msra.mxu0 %v446
          %1177 = vmatmul.f32.gmra.mxu0 %v1039
          %v1178 = vpop.f32.mrf.mxu0
          %v1179 = vadd.f32 0.0, %v1178
          %1180 = vdwg.mxu0
          %1181 = vmatpush.msra.mxu0 0.0
          %1182 = vmatpush.msra.mxu0 0.0
          %1183 = vmatpush.msra.mxu0 0.0
          %1184 = vmatpush.msra.mxu0 %v586
          %1185 = vmatpush.msra.mxu0 %v546
          %1186 = vmatpush.msra.mxu0 %v537
          %1187 = vmatpush.msra.mxu0 %v528
          %1188 = vmatpush.msra.mxu0 %v519
          %1189 = vmatpush.msra.mxu0 %v510
          %1190 = vmatpush.msra.mxu0 %v501
          %1191 = vmatpush.msra.mxu0 %v492
          %1192 = vmatpush.msra.mxu0 %v483
          %1193 = vmatpush.msra.mxu0 %v474
          %1194 = vmatpush.msra.mxu0 %v465
          %1195 = vmatpush.msra.mxu0 %v456
          %1196 = vmatpush.msra.mxu0 %v447
          %1197 = vmatmul.f32.gmra.mxu0 %v1039
          %v1198 = vpop.f32.mrf.mxu0
          %v1199 = vadd.f32 0.0, %v1198
          %1200 = vdwg.mxu0
          %1201 = vmatpush.msra.mxu0 0.0
          %1202 = vmatpush.msra.mxu0 0.0
          %1203 = vmatpush.msra.mxu0 0.0
          %1204 = vmatpush.msra.mxu0 %v589
          %1205 = vmatpush.msra.mxu0 %v547
          %1206 = vmatpush.msra.mxu0 %v538
          %1207 = vmatpush.msra.mxu0 %v529
          %1208 = vmatpush.msra.mxu0 %v520
          %1209 = vmatpush.msra.mxu0 %v511
          %1210 = vmatpush.msra.mxu0 %v502
          %1211 = vmatpush.msra.mxu0 %v493
          %1212 = vmatpush.msra.mxu0 %v484
          %1213 = vmatpush.msra.mxu0 %v475
          %1214 = vmatpush.msra.mxu0 %v466
          %1215 = vmatpush.msra.mxu0 %v457
          %1216 = vmatpush.msra.mxu0 %v448
          %1217 = vmatmul.f32.gmra.mxu0 %v1039
          %v1218 = vpop.f32.mrf.mxu0
          %v1219 = vadd.f32 0.0, %v1218
          %1220 = vdwg.mxu0
          %v1221 = vld [vmem:[%s5] sm:$0xf]
          %s1222 = scalar_lea.vmem %s5, 4
          %v1223 = vld [vmem:[%s1222] sm:$0xf]
          %vm1224 = vcmask 15360
          %v1226 = vsel %vm1224, %v1223, 0
          %vm1228 = vcmask 1041408
          %v1230 = vsel %vm1228, %v1079, 0
          %1232 = vmatpush.msra.mxu0 0.0
          %1233 = vmatpush.msra.mxu0 0.0
          %1234 = vmatpush.msra.mxu0 0.0
          %1235 = vmatpush.msra.mxu0 0.0
          %1236 = vmatpush.msra.mxu0 0.0
          %1237 = vmatpush.msra.mxu0 0.0
          %1238 = vmatpush.msra.mxu0 0.0
          %1239 = vmatpush.msra.mxu0 0.0
          %1240 = vmatpush.msra.mxu0 0.0
          %1241 = vmatpush.msra.mxu0 0.0
          %1242 = vmatpush.msra.mxu0 0.0
          %1243 = vmatpush.msra.mxu0 0.0
          %1244 = vmatpush.msra.mxu0 0.0
          %1245 = vmatpush.msra.mxu0 0.0
          %1246 = vmatpush.msra.mxu0 0.0
          %1247 = vmatpush.msra.mxu0 %v1230
          %1248 = vmatmul.f32.gmra.mxu0 %v1226
          %v1249 = vpop.f32.mrf.mxu0
          %v1250 = vadd.f32 0.0, %v1249
          %1251 = vdwg.mxu0
          %v1253 = vsel %vm1224, %v1221, 0
          %v1256 = vsel %vm1228, %v1059, 0
          %1258 = vmatpush.msra.mxu0 0.0
          %1259 = vmatpush.msra.mxu0 0.0
          %1260 = vmatpush.msra.mxu0 0.0
          %1261 = vmatpush.msra.mxu0 0.0
          %1262 = vmatpush.msra.mxu0 0.0
          %1263 = vmatpush.msra.mxu0 0.0
          %1264 = vmatpush.msra.mxu0 0.0
          %1265 = vmatpush.msra.mxu0 0.0
          %1266 = vmatpush.msra.mxu0 0.0
          %1267 = vmatpush.msra.mxu0 0.0
          %1268 = vmatpush.msra.mxu0 0.0
          %1269 = vmatpush.msra.mxu0 0.0
          %1270 = vmatpush.msra.mxu0 0.0
          %1271 = vmatpush.msra.mxu0 0.0
          %1272 = vmatpush.msra.mxu0 0.0
          %1273 = vmatpush.msra.mxu0 %v1256
          %1274 = vmatmul.f32.gmra.mxu0 %v1253
          %v1275 = vpop.f32.mrf.mxu0
          %v1276 = vadd.f32 %v1250, %v1275
          %1277 = vdwg.mxu0
          %s1278 = scalar_lea.vmem %s5, 8
          %v1279 = vld [vmem:[%s1278] sm:$0xf]
          %v1281 = vsel %vm1224, %v1279, 0
          %v1284 = vsel %vm1228, %v1099, 0
          %1286 = vmatpush.msra.mxu0 0.0
          %1287 = vmatpush.msra.mxu0 0.0
          %1288 = vmatpush.msra.mxu0 0.0
          %1289 = vmatpush.msra.mxu0 0.0
          %1290 = vmatpush.msra.mxu0 0.0
          %1291 = vmatpush.msra.mxu0 0.0
          %1292 = vmatpush.msra.mxu0 0.0
          %1293 = vmatpush.msra.mxu0 0.0
          %1294 = vmatpush.msra.mxu0 0.0
          %1295 = vmatpush.msra.mxu0 0.0
          %1296 = vmatpush.msra.mxu0 0.0
          %1297 = vmatpush.msra.mxu0 0.0
          %1298 = vmatpush.msra.mxu0 0.0
          %1299 = vmatpush.msra.mxu0 0.0
          %1300 = vmatpush.msra.mxu0 0.0
          %1301 = vmatpush.msra.mxu0 %v1284
          %1302 = vmatmul.f32.gmra.mxu0 %v1281
          %v1303 = vpop.f32.mrf.mxu0
          %v1304 = vadd.f32 0.0, %v1303
          %1305 = vdwg.mxu0
          %v1306 = vadd.f32 %v1276, %v1304
          %s1307 = scalar_lea.vmem %s5, 12
          %v1308 = vld [vmem:[%s1307] sm:$0xf]
          %v1310 = vsel %vm1224, %v1308, 0
          %v1313 = vsel %vm1228, %v1119, 0
          %1315 = vmatpush.msra.mxu0 0.0
          %1316 = vmatpush.msra.mxu0 0.0
          %1317 = vmatpush.msra.mxu0 0.0
          %1318 = vmatpush.msra.mxu0 0.0
          %1319 = vmatpush.msra.mxu0 0.0
          %1320 = vmatpush.msra.mxu0 0.0
          %1321 = vmatpush.msra.mxu0 0.0
          %1322 = vmatpush.msra.mxu0 0.0
          %1323 = vmatpush.msra.mxu0 0.0
          %1324 = vmatpush.msra.mxu0 0.0
          %1325 = vmatpush.msra.mxu0 0.0
          %1326 = vmatpush.msra.mxu0 0.0
          %1327 = vmatpush.msra.mxu0 0.0
          %1328 = vmatpush.msra.mxu0 0.0
          %1329 = vmatpush.msra.mxu0 0.0
          %1330 = vmatpush.msra.mxu0 %v1313
          %1331 = vmatmul.f32.gmra.mxu0 %v1310
          %v1332 = vpop.f32.mrf.mxu0
          %v1333 = vadd.f32 0.0, %v1332
          %1334 = vdwg.mxu0
          %v1335 = vadd.f32 %v1306, %v1333
          %s1336 = scalar_lea.vmem %s5, 16
          %v1337 = vld [vmem:[%s1336] sm:$0xf]
          %v1339 = vsel %vm1224, %v1337, 0
          %v1342 = vsel %vm1228, %v1139, 0
          %1344 = vmatpush.msra.mxu0 0.0
          %1345 = vmatpush.msra.mxu0 0.0
          %1346 = vmatpush.msra.mxu0 0.0
          %1347 = vmatpush.msra.mxu0 0.0
          %1348 = vmatpush.msra.mxu0 0.0
          %1349 = vmatpush.msra.mxu0 0.0
          %1350 = vmatpush.msra.mxu0 0.0
          %1351 = vmatpush.msra.mxu0 0.0
          %1352 = vmatpush.msra.mxu0 0.0
          %1353 = vmatpush.msra.mxu0 0.0
          %1354 = vmatpush.msra.mxu0 0.0
          %1355 = vmatpush.msra.mxu0 0.0
          %1356 = vmatpush.msra.mxu0 0.0
          %1357 = vmatpush.msra.mxu0 0.0
          %1358 = vmatpush.msra.mxu0 0.0
          %1359 = vmatpush.msra.mxu0 %v1342
          %1360 = vmatmul.f32.gmra.mxu0 %v1339
          %v1361 = vpop.f32.mrf.mxu0
          %v1362 = vadd.f32 0.0, %v1361
          %1363 = vdwg.mxu0
          %v1364 = vadd.f32 %v1335, %v1362
          %s1365 = scalar_lea.vmem %s5, 20
          %v1366 = vld [vmem:[%s1365] sm:$0xf]
          %v1368 = vsel %vm1224, %v1366, 0
          %v1371 = vsel %vm1228, %v1159, 0
          %1373 = vmatpush.msra.mxu0 0.0
          %1374 = vmatpush.msra.mxu0 0.0
          %1375 = vmatpush.msra.mxu0 0.0
          %1376 = vmatpush.msra.mxu0 0.0
          %1377 = vmatpush.msra.mxu0 0.0
          %1378 = vmatpush.msra.mxu0 0.0
          %1379 = vmatpush.msra.mxu0 0.0
          %1380 = vmatpush.msra.mxu0 0.0
          %1381 = vmatpush.msra.mxu0 0.0
          %1382 = vmatpush.msra.mxu0 0.0
          %1383 = vmatpush.msra.mxu0 0.0
          %1384 = vmatpush.msra.mxu0 0.0
          %1385 = vmatpush.msra.mxu0 0.0
          %1386 = vmatpush.msra.mxu0 0.0
          %1387 = vmatpush.msra.mxu0 0.0
          %1388 = vmatpush.msra.mxu0 %v1371
          %1389 = vmatmul.f32.gmra.mxu0 %v1368
          %v1390 = vpop.f32.mrf.mxu0
          %v1391 = vadd.f32 0.0, %v1390
          %1392 = vdwg.mxu0
          %v1393 = vadd.f32 %v1364, %v1391
          %s1394 = scalar_lea.vmem %s5, 24
          %v1395 = vld [vmem:[%s1394] sm:$0xf]
          %v1397 = vsel %vm1224, %v1395, 0
          %v1400 = vsel %vm1228, %v1179, 0
          %1402 = vmatpush.msra.mxu0 0.0
          %1403 = vmatpush.msra.mxu0 0.0
          %1404 = vmatpush.msra.mxu0 0.0
          %1405 = vmatpush.msra.mxu0 0.0
          %1406 = vmatpush.msra.mxu0 0.0
          %1407 = vmatpush.msra.mxu0 0.0
          %1408 = vmatpush.msra.mxu0 0.0
          %1409 = vmatpush.msra.mxu0 0.0
          %1410 = vmatpush.msra.mxu0 0.0
          %1411 = vmatpush.msra.mxu0 0.0
          %1412 = vmatpush.msra.mxu0 0.0
          %1413 = vmatpush.msra.mxu0 0.0
          %1414 = vmatpush.msra.mxu0 0.0
          %1415 = vmatpush.msra.mxu0 0.0
          %1416 = vmatpush.msra.mxu0 0.0
          %1417 = vmatpush.msra.mxu0 %v1400
          %1418 = vmatmul.f32.gmra.mxu0 %v1397
          %v1419 = vpop.f32.mrf.mxu0
          %v1420 = vadd.f32 0.0, %v1419
          %1421 = vdwg.mxu0
          %v1422 = vadd.f32 %v1393, %v1420
          %s1423 = scalar_lea.vmem %s5, 28
          %v1424 = vld [vmem:[%s1423] sm:$0xf]
          %v1426 = vsel %vm1224, %v1424, 0
          %v1429 = vsel %vm1228, %v1199, 0
          %1431 = vmatpush.msra.mxu0 0.0
          %1432 = vmatpush.msra.mxu0 0.0
          %1433 = vmatpush.msra.mxu0 0.0
          %1434 = vmatpush.msra.mxu0 0.0
          %1435 = vmatpush.msra.mxu0 0.0
          %1436 = vmatpush.msra.mxu0 0.0
          %1437 = vmatpush.msra.mxu0 0.0
          %1438 = vmatpush.msra.mxu0 0.0
          %1439 = vmatpush.msra.mxu0 0.0
          %1440 = vmatpush.msra.mxu0 0.0
          %1441 = vmatpush.msra.mxu0 0.0
          %1442 = vmatpush.msra.mxu0 0.0
          %1443 = vmatpush.msra.mxu0 0.0
          %1444 = vmatpush.msra.mxu0 0.0
          %1445 = vmatpush.msra.mxu0 0.0
          %1446 = vmatpush.msra.mxu0 %v1429
          %1447 = vmatmul.f32.gmra.mxu0 %v1426
          %v1448 = vpop.f32.mrf.mxu0
          %v1449 = vadd.f32 0.0, %v1448
          %1450 = vdwg.mxu0
          %v1451 = vadd.f32 %v1422, %v1449
          %s1452 = scalar_lea.vmem %s5, 32
          %v1453 = vld [vmem:[%s1452] sm:$0xf]
          %v1455 = vsel %vm1224, %v1453, 0
          %v1458 = vsel %vm1228, %v1219, 0
          %1460 = vmatpush.msra.mxu0 0.0
          %1461 = vmatpush.msra.mxu0 0.0
          %1462 = vmatpush.msra.mxu0 0.0
          %1463 = vmatpush.msra.mxu0 0.0
          %1464 = vmatpush.msra.mxu0 0.0
          %1465 = vmatpush.msra.mxu0 0.0
          %1466 = vmatpush.msra.mxu0 0.0
          %1467 = vmatpush.msra.mxu0 0.0
          %1468 = vmatpush.msra.mxu0 0.0
          %1469 = vmatpush.msra.mxu0 0.0
          %1470 = vmatpush.msra.mxu0 0.0
          %1471 = vmatpush.msra.mxu0 0.0
          %1472 = vmatpush.msra.mxu0 0.0
          %1473 = vmatpush.msra.mxu0 0.0
          %1474 = vmatpush.msra.mxu0 0.0
          %1475 = vmatpush.msra.mxu0 %v1458
          %1476 = vmatmul.f32.gmra.mxu0 %v1455
          %v1477 = vpop.f32.mrf.mxu0
          %v1478 = vadd.f32 0.0, %v1477
          %1479 = vdwg.mxu0
          %v1480 = vadd.f32 %v1451, %v1478
          %1482 = vset.pattern.permute.xlu0 0
          %1483 = vperm.xlu0 %1482, %v1037
          %v1484 = vpop.permute.xlu0 %1483
          %v1486 = vadd.f32 %v1480, %v1484
          %1487 = vst.msk [vmem:[%s347] sm:$0xf] %vm435, %v1486
        $region64: #{channel_attention_spatial_level.2} parent=47 // pred_fallthru
          _
        %p1488 = scmp.lt.s32.totalorder %s24, 1
        %s1489 = scalar_select %p1488, %s24, 1
        %s1490 = smul.addr %s1489, 4
        %s1491 = scalar_lea.vmem %s7, %s1490
        // Predicated region
        $region65: #{channel_attention_spatial_level.2} parent=47 // pred_check
          %p1492 = pneg %p209
        $region66: #{channel_attention_spatial_level.2} parent=47 // pred_check_branch
          %1494 = sbr.rel (%p1492) target = $region68
        $region67: #{channel_attention_spatial_level.2} parent=47 // pred_region
          _
        $region68: #{channel_attention_spatial_level.2} parent=47 // pred_fallthru
          _
      $region48: #{channel_attention_spatial_level.2} parent=5 // pred_fallthru
        _
      %p1495 = scmp.le.s32.totalorder 2, %s15
      // Predicated region
      $region69: #{channel_attention_spatial_level.2} parent=5 // pred_check
        %p1496 = pneg %p1495
      $region70: #{channel_attention_spatial_level.2} parent=5 // pred_check_branch
        %1498 = sbr.rel (%p1496) target = $region72
      $region71: #{channel_attention_spatial_level.2} parent=5 // pred_region
        %s1499 = ssub.s32 %s15, 2
        // Predicated region
        $region73: #{channel_attention_spatial_level.2} parent=71 // pred_check
          %p1500 = pneg %p215
        $region74: #{channel_attention_spatial_level.2} parent=71 // pred_check_branch
          %1502 = sbr.rel (%p1500) target = $region76
        $region75: #{channel_attention_spatial_level.2} parent=71 // pred_region
          %p1503 = scmp.lt.s32.totalorder %s26, 1
          %s1504 = scalar_select %p1503, %s26, 1
          %s1505 = smul.addr %s1504, 4
          %s1506 = scalar_lea.vmem %s7, %s1505
        $region76: #{channel_attention_spatial_level.2} parent=71 // pred_fallthru
          _
      $region72: #{channel_attention_spatial_level.2} parent=5 // pred_fallthru
        _
    $region6: #{channel_attention_spatial_level.2} parent=1 // loop_footer
      %s19 = sadd.s32 1, %s15
    $region7: #{channel_attention_spatial_level.2} parent=1 // loop_footer_branch
      %14 = sbr.rel target = $region3
    $region8: #{channel_attention_spatial_level.2} parent=1 // loop_exit
      _
    %1507 = vsyncpa [#allocation4], 1
    %s1508 = scalar_lea.sflag [#allocation4], 1
    %1509 = vsyncpa %s1508, 1
    %1510 = vsyncpa [#allocation6], 1

</llo_original>
